<compile_context>
chip_gen: v7x
topology: tpu7x:2x2x1
jax: 0.10.0
libtpu: 0.0.40
codegen_flags: <defaults>
</compile_context>

<pallas_src>
import math

import jax
import jax.numpy as jnp
from jax.experimental import pallas as pl
from jax.experimental.pallas import tpu as pltpu


def _round_up(x, m):
    return (x + m - 1) // m * m


def _pad_to(a, shape):
    return jnp.pad(a, [(0, s - d) for d, s in zip(a.shape, shape)])


def _vmem_limit_bytes():
    """Scoped-VMEM budget: ~75% of physical VMEM, capped at 96 MiB.
    v5e/v6e (128 MiB physical) -> 96 MiB, v7x (64 MiB per TensorCore) -> 48 MiB."""
    try:
        phys = pltpu.get_tpu_info().vmem_capacity_bytes
    except Exception:
        phys = 64 * 1024 * 1024            # conservative fallback (v7x floor)
    return min(int(phys) * 3 // 4, 96 * 1024 * 1024)


# ---------------------------------------------------------------------------
# Kernel bodies
# ---------------------------------------------------------------------------
def gcn_layer1_fused_kernel(a_ref, x_ref, w1_ref, b1_ref, w2_ref, o_ref, acc_ref):
    """Row stripe i of   HW2 = relu((A_hat @ X) @ W1 + b1) @ W2.

    A_hat is streamed in (tm, tk) tiles over the k grid axis; X is resident in
    VMEM (constant index_map) and sliced with pl.ds.  The two small dense
    weight matmuls ride in the last-k epilogue under MXU slack, so A_hat@X,
    H1 and HW1 never touch HBM."""
    k = pl.program_id(1)

    @pl.when(k == 0)
    def _():
        acc_ref[...] = jnp.zeros_like(acc_ref)

    tk = a_ref.shape[1]
    off = pl.multiple_of(k * tk, tk)
    acc_ref[...] += jnp.dot(a_ref[...], x_ref[pl.ds(off, tk), :],
                            preferred_element_type=jnp.float32)

    @pl.when(k == pl.num_programs(1) - 1)
    def _():
        ax = acc_ref[...].astype(jnp.bfloat16)
        h1 = jnp.maximum(
            jnp.dot(ax, w1_ref[...], preferred_element_type=jnp.float32)
            + b1_ref[...], 0.0).astype(jnp.bfloat16)
        o_ref[...] = jnp.dot(h1, w2_ref[...],
                             preferred_element_type=jnp.float32).astype(o_ref.dtype)


def gcn_layer2_pool_mlp_kernel(a_ref, m_ref, b2_ref, pool_ref,
                               wc1_ref, bc1_ref, wc2_ref, bc2_ref,
                               out_ref, acc_ref, z_ref):
    """Row stripe i of H2 = relu(A_hat @ HW2 + b2); the central-frame mean
    pooling (Z += pool_tile @ H2_tile) and the 2-layer classifier MLP are
    folded into the epilogues so H2 never hits HBM.  HW2 is VMEM-resident.

    z_ref accumulates across the i axis, so both grid axes stay 'arbitrary'
    (single-core).  TODO(synk): on v7x (2 TCs) emit per-i partial-Z output
    blocks and do the tiny reduce + classifier MLP outside the kernel so the
    i axis can be 'parallel'."""
    i = pl.program_id(0)
    k = pl.program_id(1)
    last_i = pl.num_programs(0) - 1
    last_k = pl.num_programs(1) - 1

    @pl.when(jnp.logical_and(i == 0, k == 0))
    def _():
        z_ref[...] = jnp.zeros_like(z_ref)

    @pl.when(k == 0)
    def _():
        acc_ref[...] = jnp.zeros_like(acc_ref)

    tk = a_ref.shape[1]
    off = pl.multiple_of(k * tk, tk)
    acc_ref[...] += jnp.dot(a_ref[...], m_ref[pl.ds(off, tk), :],
                            preferred_element_type=jnp.float32)

    @pl.when(k == last_k)
    def _():
        h2 = jnp.maximum(acc_ref[...] + b2_ref[...], 0.0).astype(jnp.bfloat16)
        z_ref[...] += jnp.dot(pool_ref[...], h2,
                              preferred_element_type=jnp.float32)

    @pl.when(jnp.logical_and(i == last_i, k == last_k))
    def _():
        z = z_ref[...].astype(jnp.bfloat16)
        c1 = jnp.maximum(
            jnp.dot(z, wc1_ref[...], preferred_element_type=jnp.float32)
            + bc1_ref[...], 0.0).astype(jnp.bfloat16)
        out_ref[...] = (jnp.dot(c1, wc2_ref[...],
                                preferred_element_type=jnp.float32)
                        + bc2_ref[...])


# ---------------------------------------------------------------------------
# pallas_call wrappers
# ---------------------------------------------------------------------------
def _layer1_fused(adj, x, w1, b1, w2, *, tm, tk, vmem_limit):
    n = adj.shape[0]
    f = x.shape[1]
    h = w1.shape[1]
    grid = (n // tm, n // tk)
    flops = 2 * n * n * f + 2 * n * f * h + 2 * n * h * h
    bytes_accessed = (2 * n * n            # A_hat stream
                      + 2 * n * f          # resident X, read once
                      + 2 * (f * h + h * h) + 4 * h
                      + 2 * n * h)         # HW2 output
    return pl.pallas_call(
        gcn_layer1_fused_kernel,
        out_shape=jax.ShapeDtypeStruct((n, h), jnp.bfloat16),
        grid_spec=pltpu.PrefetchScalarGridSpec(
            num_scalar_prefetch=0,
            grid=grid,
            in_specs=[
                # TODO(synk): pipeline_mode=pl.Buffered(3) on the adj stream if
                # the trace shows exposed DMA at i-stripe transitions.
                pl.BlockSpec((tm, tk), lambda i, k: (i, k)),   # A_hat tiles
                pl.BlockSpec((n, f), lambda i, k: (0, 0)),     # X (VMEM-resident)
                pl.BlockSpec((f, h), lambda i, k: (0, 0)),     # W1
                pl.BlockSpec((1, h), lambda i, k: (0, 0)),     # b1
                pl.BlockSpec((h, h), lambda i, k: (0, 0)),     # W2
            ],
            out_specs=pl.BlockSpec((tm, h), lambda i, k: (i, 0)),
            scratch_shapes=[pltpu.VMEM((tm, f), jnp.float32)],
        ),
        compiler_params=pltpu.CompilerParams(
            dimension_semantics=("parallel", "arbitrary"),
            vmem_limit_bytes=vmem_limit),
        cost_estimate=pl.CostEstimate(
            flops=flops, transcendentals=0, bytes_accessed=bytes_accessed),
    )(adj, x, w1, b1, w2)


def _layer2_pool_mlp(adj, m, b2, pool, wc1, bc1, wc2, bc2, *, tm, tk, vmem_limit):
    n = adj.shape[0]
    h = m.shape[1]
    g = pool.shape[0]
    c = wc2.shape[1]
    grid = (n // tm, n // tk)
    flops = 2 * n * n * h + 2 * g * n * h + 2 * g * h * h + 2 * g * h * c
    bytes_accessed = (2 * n * n            # A_hat stream
                      + 2 * n * h          # resident HW2, read once
                      + 2 * g * n          # pool (one column stripe per i)
                      + 2 * (h * h + h * c) + 4 * (h + c)
                      + 4 * g * c)         # logits output
    return pl.pallas_call(
        gcn_layer2_pool_mlp_kernel,
        out_shape=jax.ShapeDtypeStruct((g, c), jnp.float32),
        grid_spec=pltpu.PrefetchScalarGridSpec(
            num_scalar_prefetch=0,
            grid=grid,
            in_specs=[
                pl.BlockSpec((tm, tk), lambda i, k: (i, k)),   # A_hat tiles
                pl.BlockSpec((n, h), lambda i, k: (0, 0)),     # HW2 (VMEM-resident)
                pl.BlockSpec((1, h), lambda i, k: (0, 0)),     # b2
                pl.BlockSpec((g, tm), lambda i, k: (0, i)),    # pool column stripe
                pl.BlockSpec((h, h), lambda i, k: (0, 0)),     # Wc1
                pl.BlockSpec((1, h), lambda i, k: (0, 0)),     # bc1
                pl.BlockSpec((h, c), lambda i, k: (0, 0)),     # Wc2
                pl.BlockSpec((1, c), lambda i, k: (0, 0)),     # bc2
            ],
            out_specs=pl.BlockSpec((g, c), lambda i, k: (0, 0)),
            scratch_shapes=[pltpu.VMEM((tm, h), jnp.float32),
                            pltpu.VMEM((g, h), jnp.float32)],
        ),
        compiler_params=pltpu.CompilerParams(
            # z_ref accumulates across i -> both axes must stay 'arbitrary'.
            dimension_semantics=("arbitrary", "arbitrary"),
            vmem_limit_bytes=vmem_limit),
        cost_estimate=pl.CostEstimate(
            flops=flops, transcendentals=0, bytes_accessed=bytes_accessed),
    )(adj, m, b2, pool, wc1, bc1, wc2, bc2)


def graph_classifier_forward(adj, x, pool, params, *, tm=256, tk=512):
    """Full forward pass (readout='mean').

    Pads the node dim to lcm(tm, tk), feature/hidden/class dims to 128 lanes
    and the graph dim to 16 (bf16 packs two rows per sublane), casts MXU
    operands to bf16 (f32 accumulation inside the kernels) and runs the two
    fused phases.  Returns [G, C] f32 logits.

    Tiling: tm=256/tk=512 default.  On v6e with large N prefer tm=512 /
    tk=1024-2048; on v7x re-derive the VMEM budget (64 MiB per TensorCore)."""
    n = adj.shape[0]
    g, c = pool.shape[0], params["wc2"].shape[1]
    f_in = x.shape[1]
    hid = params["w1"].shape[1]

    n_pad = _round_up(n, math.lcm(tm, tk))
    f_pad = _round_up(f_in, 128)
    h_pad = _round_up(hid, 128)
    c_pad = _round_up(c, 128)
    g_pad = _round_up(g, 16)   # full packed (16,128) bf16 tile for the pool matmul

    vmem_limit = _vmem_limit_bytes()
    # Resident operands (X in phase 1, HW2 in phase 2) live in VMEM next to the
    # adj double-buffers and the f32 accumulator.
    # TODO(synk): re-stream the dense operand in k-tiles when
    # n_pad*max(f_pad,h_pad)*2B exceeds ~1/3 of the VMEM budget (very large N).

    bf16 = jnp.bfloat16
    adj_p = _pad_to(adj, (n_pad, n_pad)).astype(bf16)
    x_p = _pad_to(x, (n_pad, f_pad)).astype(bf16)
    pool_p = _pad_to(pool, (g_pad, n_pad)).astype(bf16)

    w1 = _pad_to(params["w1"], (f_pad, h_pad)).astype(bf16)
    w2 = _pad_to(params["w2"], (h_pad, h_pad)).astype(bf16)
    wc1 = _pad_to(params["wc1"], (h_pad, h_pad)).astype(bf16)
    wc2 = _pad_to(params["wc2"], (h_pad, c_pad)).astype(bf16)
    b1 = _pad_to(params["b1"], (1, h_pad)).astype(jnp.float32)
    b2 = _pad_to(params["b2"], (1, h_pad)).astype(jnp.float32)
    bc1 = _pad_to(params["bc1"], (1, h_pad)).astype(jnp.float32)
    bc2 = _pad_to(params["bc2"], (1, c_pad)).astype(jnp.float32)

    # TODO(synk): when f_pad > h_pad, computing X@W1 first in a small row-tiled
    # matmul kernel is FLOP-cheaper than the fused (A_hat@X)@W1 below (results
    # are identical up to bf16 rounding either way).
    hw2 = _layer1_fused(adj_p, x_p, w1, b1, w2, tm=tm, tk=tk,
                        vmem_limit=vmem_limit)               # [n_pad, h_pad] bf16
    logits_pad = _layer2_pool_mlp(adj_p, hw2, b2, pool_p,
                                  wc1, bc1, wc2, bc2, tm=tm, tk=tk,
                                  vmem_limit=vmem_limit)     # [g_pad, c_pad] f32
    return logits_pad[:g, :c]


# ---------------------------------------------------------------------------
# Plain-JAX glue: graph structure -> dense operands
# ---------------------------------------------------------------------------
def build_norm_adj(edge_index, num_nodes):
    """GCN-style symmetric normalized adjacency with self-loops."""
    src, dst = edge_index
    A = jnp.zeros((num_nodes, num_nodes), jnp.float32)
    A = A.at[src, dst].set(1.0)
    A = jnp.maximum(A, A.T)                        # undirected
    A = A + jnp.eye(num_nodes, dtype=jnp.float32)  # self-loops
    deg = jnp.sum(A, axis=1)
    dinv = 1.0 / jnp.sqrt(deg)
    return A * dinv[:, None] * dinv[None, :]


def build_mean_pool(graph_batch, frame_mask, num_graphs):
    """pool[g] = mean-pool selector over nodes of graph g whose frame_mask
    equals the per-graph (lower) median frame — matches
    GraphClassifier.mean_pooling_per_graph."""
    rows = []
    big = jnp.array(2 ** 30, dtype=frame_mask.dtype)
    for g in range(num_graphs):
        in_graph = graph_batch == g
        cnt = jnp.sum(in_graph)
        vals = jnp.where(in_graph, frame_mask, big)
        sorted_vals = jnp.sort(vals)
        median = sorted_vals[(cnt - 1) // 2]       # torch lower median
        sel = (in_graph & (frame_mask == median)).astype(jnp.float32)
        rows.append(sel / jnp.maximum(jnp.sum(sel), 1.0))
    return jnp.stack(rows)                          # [G, N]


# ---------------------------------------------------------------------------
# Pure-JAX reference (mirrors the kernels' bf16-operand / f32-accum numerics
# and the (A_hat @ X) @ W1 reassociation used in phase 1)
# ---------------------------------------------------------------------------
def reference_forward(adj, x, pool, p):
    dot = lambda a, b: jnp.dot(a.astype(jnp.bfloat16), b.astype(jnp.bfloat16),
                               preferred_element_type=jnp.float32)
    ax = dot(adj, x)
    h1 = jnp.maximum(dot(ax, p["w1"]) + p["b1"], 0.0)
    hw2 = dot(h1, p["w2"])
    h2 = jnp.maximum(dot(adj, hw2) + p["b2"], 0.0)
    z = dot(pool, h2)
    c1 = jnp.maximum(dot(z, p["wc1"]) + p["bc1"], 0.0)
    return dot(c1, p["wc2"]) + p["bc2"]


if __name__ == "__main__":
    key = jax.random.PRNGKey(0)

    # 2 graphs x 288 nodes (3 frames of 96 nodes).  N=576 pads to 1024 with the
    # default tm=256/tk=512 -> a real (4, 2) row x K tile grid that exercises
    # the accumulator init/epilogue logic and the resident-operand slicing.
    G = 2
    NODES_PER_GRAPH = 288
    N = G * NODES_PER_GRAPH
    N_FRAMES = 3
    F_IN, HID, N_CLASSES = 16, 32, 4

    graph_batch = jnp.repeat(jnp.arange(G, dtype=jnp.int32), NODES_PER_GRAPH)
    frame_mask = jnp.tile(
        jnp.repeat(jnp.arange(N_FRAMES, dtype=jnp.int32),
                   NODES_PER_GRAPH // N_FRAMES), G)

    # chain edges inside each graph
    src = jnp.concatenate([jnp.arange(g * NODES_PER_GRAPH,
                                      (g + 1) * NODES_PER_GRAPH - 1)
                           for g in range(G)]).astype(jnp.int32)
    dst = src + 1
    edge_index = jnp.stack([src, dst])

    k_x, k1, k2, k3, k4, k5, k6, k7, k8 = jax.random.split(key, 9)
    x = jax.random.normal(k_x, (N, F_IN), dtype=jnp.float32)

    params = {
        "w1":  0.2 * jax.random.normal(k1, (F_IN, HID), dtype=jnp.float32),
        "b1":  0.1 * jax.random.normal(k5, (1, HID), dtype=jnp.float32),
        "w2":  0.2 * jax.random.normal(k2, (HID, HID), dtype=jnp.float32),
        "b2":  0.1 * jax.random.normal(k6, (1, HID), dtype=jnp.float32),
        "wc1": 0.2 * jax.random.normal(k3, (HID, HID), dtype=jnp.float32),
        "bc1": 0.1 * jax.random.normal(k7, (1, HID), dtype=jnp.float32),
        "wc2": 0.2 * jax.random.normal(k4, (HID, N_CLASSES), dtype=jnp.float32),
        "bc2": 0.1 * jax.random.normal(k8, (1, N_CLASSES), dtype=jnp.float32),
    }

    adj = build_norm_adj(edge_index, N)
    pool = build_mean_pool(graph_batch, frame_mask, G)

    logits = graph_classifier_forward(adj, x, pool, params)   # default tm=256, tk=512
    jax.block_until_ready(logits)

    ref = reference_forward(adj, x, pool, params)
    assert logits.shape == (G, N_CLASSES)
    assert jnp.allclose(logits, ref, atol=2e-2, rtol=2e-2), \
        float(jnp.max(jnp.abs(logits - ref)))

    # TODO(synk): attention_readout is `pass` in the PyTorch module; nothing to implement.
    print("KERNEL_OK")
</pallas_src>

<mosaic_0001>
module attributes {stable_mosaic.version = 11 : i64} {
  func.func @gcn_layer1_fused_kernel(%arg0: i32, %arg1: i32, %arg2: memref<256x512xbf16, #tpu.memory_space<vmem>>, %arg3: memref<1024x128xbf16, #tpu.memory_space<vmem>>, %arg4: memref<128x128xbf16, #tpu.memory_space<vmem>>, %arg5: memref<1x128xf32, #tpu.memory_space<vmem>>, %arg6: memref<128x128xbf16, #tpu.memory_space<vmem>>, %arg7: memref<256x128xbf16, #tpu.memory_space<vmem>>, %arg8: memref<256x128xf32, #tpu.memory_space<vmem>>) attributes {dimension_semantics = [#tpu.dimension_semantics<parallel>, #tpu.dimension_semantics<arbitrary>], iteration_bounds = array<i64: 4, 2>, scalar_prefetch = 0 : i64, scratch_operands = 1 : i64, tpu.core_type = #tpu.core_type<tc>, window_params = [{transform_indices = @transform_0, window_bounds = array<i64: 256, 512>}, {pipeline_mode = #tpu.pipeline_mode<synchronous>, transform_indices = @transform_1, window_bounds = array<i64: 1024, 128>}, {pipeline_mode = #tpu.pipeline_mode<synchronous>, transform_indices = @transform_2, window_bounds = array<i64: 128, 128>}, {pipeline_mode = #tpu.pipeline_mode<synchronous>, transform_indices = @transform_3, window_bounds = array<i64: 1, 128>}, {pipeline_mode = #tpu.pipeline_mode<synchronous>, transform_indices = @transform_4, window_bounds = array<i64: 128, 128>}, {transform_indices = @transform_5, window_bounds = array<i64: 256, 128>}]} {
    %c0_i32 = arith.constant 0 : i32
    %0 = arith.cmpi eq, %arg1, %c0_i32 : i32
    %1 = arith.extui %0 : i1 to i32
    %c0_i32_0 = arith.constant 0 : i32
    %2 = arith.cmpi ne, %1, %c0_i32_0 : i32
    scf.if %2 {
      %cst_8 = arith.constant 0.000000e+00 : f32
      %15 = vector.broadcast %cst_8 : f32 to vector<256x128xf32>
      %c0_9 = arith.constant 0 : index
      %c0_10 = arith.constant 0 : index
      %16 = vector.load %arg8[%c0_9, %c0_10] : memref<256x128xf32, #tpu.memory_space<vmem>>, vector<256x128xf32>
      tpu.vector_store %arg8[%c0_9, %c0_10], %15 {strides = array<i32>} : memref<256x128xf32, #tpu.memory_space<vmem>>, vector<256x128xf32>,
    } else {
    }
    %c512_i32 = arith.constant 512 : i32
    %3 = arith.muli %arg1, %c512_i32 : i32
    %4 = tpu.assume_multiple %3, 512 : i32
    %c0 = arith.constant 0 : index
    %c0_1 = arith.constant 0 : index
    %5 = vector.load %arg8[%c0, %c0_1] : memref<256x128xf32, #tpu.memory_space<vmem>>, vector<256x128xf32>
    %c0_2 = arith.constant 0 : index
    %c0_3 = arith.constant 0 : index
    %6 = vector.load %arg2[%c0_2, %c0_3] : memref<256x512xbf16, #tpu.memory_space<vmem>>, vector<256x512xbf16>
    %7 = arith.index_cast %4 : i32 to index
    %c0_4 = arith.constant 0 : index
    %8 = vector.load %arg3[%7, %c0_4] : memref<1024x128xbf16, #tpu.memory_space<vmem>>, vector<512x128xbf16>
    %cst = arith.constant dense<0.000000e+00> : vector<256x128xf32>
    %9 = tpu.matmul %6, %8, %cst {dimension_numbers = #tpu.dot_dimension_numbers<[1], [0], [0], [1], [0, 0, 1, 1], [], []>} : vector<256x512xbf16>, vector<512x128xbf16>, vector<256x128xf32> -> vector<256x128xf32>
    %10 = arith.addf %5, %9 : vector<256x128xf32>
    %c0_5 = arith.constant 0 : index
    %c0_6 = arith.constant 0 : index
    %11 = vector.load %arg8[%c0_5, %c0_6] : memref<256x128xf32, #tpu.memory_space<vmem>>, vector<256x128xf32>
    tpu.vector_store %arg8[%c0_5, %c0_6], %10 {strides = array<i32>} : memref<256x128xf32, #tpu.memory_space<vmem>>, vector<256x128xf32>,
    %c1_i32 = arith.constant 1 : i32
    %12 = arith.cmpi eq, %arg1, %c1_i32 : i32
    %13 = arith.extui %12 : i1 to i32
    %c0_i32_7 = arith.constant 0 : i32
    %14 = arith.cmpi ne, %13, %c0_i32_7 : i32
    scf.if %14 {
      %c0_8 = arith.constant 0 : index
      %c0_9 = arith.constant 0 : index
      %15 = vector.load %arg8[%c0_8, %c0_9] : memref<256x128xf32, #tpu.memory_space<vmem>>, vector<256x128xf32>
      %16 = arith.truncf %15 : vector<256x128xf32> to vector<256x128xbf16>
      %c0_10 = arith.constant 0 : index
      %c0_11 = arith.constant 0 : index
      %17 = vector.load %arg4[%c0_10, %c0_11] : memref<128x128xbf16, #tpu.memory_space<vmem>>, vector<128x128xbf16>
      %cst_12 = arith.constant dense<0.000000e+00> : vector<256x128xf32>
      %18 = tpu.matmul %16, %17, %cst_12 {dimension_numbers = #tpu.dot_dimension_numbers<[1], [0], [0], [1], [0, 0, 1, 1], [], []>} : vector<256x128xbf16>, vector<128x128xbf16>, vector<256x128xf32> -> vector<256x128xf32>
      %c0_13 = arith.constant 0 : index
      %c0_14 = arith.constant 0 : index
      %19 = vector.load %arg5[%c0_13, %c0_14] : memref<1x128xf32, #tpu.memory_space<vmem>>, vector<1x128xf32>
      %20 = vector.broadcast %19 : vector<1x128xf32> to vector<256x128xf32>
      %21 = arith.addf %18, %20 : vector<256x128xf32>
      %cst_15 = arith.constant 0.000000e+00 : f32
      %22 = vector.broadcast %cst_15 : f32 to vector<256x128xf32>
      %23 = arith.maximumf %21, %22 : vector<256x128xf32>
      %24 = arith.truncf %23 : vector<256x128xf32> to vector<256x128xbf16>
      %c0_16 = arith.constant 0 : index
      %c0_17 = arith.constant 0 : index
      %25 = vector.load %arg6[%c0_16, %c0_17] : memref<128x128xbf16, #tpu.memory_space<vmem>>, vector<128x128xbf16>
      %cst_18 = arith.constant dense<0.000000e+00> : vector<256x128xf32>
      %26 = tpu.matmul %24, %25, %cst_18 {dimension_numbers = #tpu.dot_dimension_numbers<[1], [0], [0], [1], [0, 0, 1, 1], [], []>} : vector<256x128xbf16>, vector<128x128xbf16>, vector<256x128xf32> -> vector<256x128xf32>
      %27 = arith.truncf %26 : vector<256x128xf32> to vector<256x128xbf16>
      %c0_19 = arith.constant 0 : index
      %c0_20 = arith.constant 0 : index
      %28 = vector.load %arg7[%c0_19, %c0_20] : memref<256x128xbf16, #tpu.memory_space<vmem>>, vector<256x128xbf16>
      tpu.vector_store %arg7[%c0_19, %c0_20], %27 {strides = array<i32>} : memref<256x128xbf16, #tpu.memory_space<vmem>>, vector<256x128xbf16>,
    } else {
    }
    return
  }
  func.func @transform_0(%arg0: i32, %arg1: i32) -> (i32, i32) {
    %c0_i32 = arith.constant 0 : i32
    return %arg0, %arg1 : i32, i32
  }
  func.func @transform_1(%arg0: i32, %arg1: i32) -> (i32, i32) {
    %c0_i32 = arith.constant 0 : i32
    %c0_i32_0 = arith.constant 0 : i32
    %c0_i32_1 = arith.constant 0 : i32
    return %c0_i32, %c0_i32_0 : i32, i32
  }
  func.func @transform_2(%arg0: i32, %arg1: i32) -> (i32, i32) {
    %c0_i32 = arith.constant 0 : i32
    %c0_i32_0 = arith.constant 0 : i32
    %c0_i32_1 = arith.constant 0 : i32
    return %c0_i32, %c0_i32_0 : i32, i32
  }
  func.func @transform_3(%arg0: i32, %arg1: i32) -> (i32, i32) {
    %c0_i32 = arith.constant 0 : i32
    %c0_i32_0 = arith.constant 0 : i32
    %c0_i32_1 = arith.constant 0 : i32
    return %c0_i32, %c0_i32_0 : i32, i32
  }
  func.func @transform_4(%arg0: i32, %arg1: i32) -> (i32, i32) {
    %c0_i32 = arith.constant 0 : i32
    %c0_i32_0 = arith.constant 0 : i32
    %c0_i32_1 = arith.constant 0 : i32
    return %c0_i32, %c0_i32_0 : i32, i32
  }
  func.func @transform_5(%arg0: i32, %arg1: i32) -> (i32, i32) {
    %c0_i32 = arith.constant 0 : i32
    %c0_i32_0 = arith.constant 0 : i32
    return %arg0, %c0_i32 : i32, i32
  }
}

</mosaic_0001>

<llo_original>
// kernel: tpu_custom_call.1
$region0: #{tpu_custom_call.1}
  #allocation0 [shape = 'u32[]', space=smem, size = 0x4, offset = 0x4, fixed_abs, tag = 'smem constant byte address 0x4 - core index']
  #allocation1 [shape = 'u32[144,128]{1,0:T(1,128)}', space=vmem, size = 0x12000, scoped, tag = 'internal scratch']
  #allocation2 [shape = 'f32[256,128]{1,0:T(8,128)}', space=vmem, size = 0x20000, scoped, tag = 'scratch operand']
  %s0 = inlined_call_operand.hbm [shape: bf16[1024,1024], index: 0, kind: input, shape index: {}]
  %s1 = inlined_call_operand.hbm [shape: bf16[1024,128], index: 1, kind: input, shape index: {}]
  %s2 = inlined_call_operand.hbm [shape: bf16[128,128], index: 2, kind: input, shape index: {}]
  %s3 = inlined_call_operand.hbm [shape: f32[1,128], index: 3, kind: input, shape index: {}]
  %s4 = inlined_call_operand.hbm [shape: bf16[128,128], index: 4, kind: input, shape index: {}]
  %s5 = inlined_call_operand.hbm [shape: bf16[1024,128], index: 5, kind: output, shape index: {}]
  %s6 = sld [smem:[#allocation0]]
  $region81: #{tpu_custom_call.1} parent=0
    _
  %s8 = ssub.s32 1, %s6
  %s9 = scalar_select 0, %s8, %s6
  $region1: #{tpu_custom_call.1} parent=0
    #allocation3 [shape = 'u8[524288]{0}', space=vmem, size = 0x80000, scoped, tag = 'input window, operand 0']
    #allocation4 [shape = 's32[2]{0}', space=sflag, size = 0x8, scoped, tag = 'scoped memory for tpu_custom_call.1']
    #allocation5 [shape = 's32[2]{0}', space=sflag, size = 0x8, scoped, tag = 'scoped memory for tpu_custom_call.1']
    #allocation6 [shape = 'u8[262144]{0}', space=vmem, size = 0x40000, scoped, tag = 'input window, operand 1, single buffered']
    #allocation7 [shape = 's32[1]{0}', space=sflag, size = 0x4, scoped, tag = 'scoped memory for tpu_custom_call.1']
    #allocation8 [shape = 'u8[32768]{0}', space=vmem, size = 0x8000, scoped, tag = 'input window, operand 2, single buffered']
    #allocation9 [shape = 'u8[512]{0}', space=vmem, size = 0x400, scoped, tag = 'input window, operand 3, single buffered']
    #allocation10 [shape = 's32[1]{0}', space=sflag, size = 0x4, scoped, tag = 'scoped memory for tpu_custom_call.1']
    #allocation11 [shape = 'u8[32768]{0}', space=vmem, size = 0x8000, scoped, tag = 'input window, operand 4, single buffered']
    #allocation12 [shape = 'u8[131072]{0}', space=vmem, size = 0x20000, scoped, tag = 'output window, operand 0']
    %10 = vsyncpa [#allocation4], 0
    %s11 = scalar_lea.sflag [#allocation4], 1
    %12 = vsyncpa %s11, 0
    %13 = vsyncpa [#allocation7], 0
    %14 = vsyncpa [#allocation10], 0
    %15 = vsyncpa [#allocation5], 0
    %s16 = scalar_lea.sflag [#allocation5], 1
    %17 = vsyncpa %s16, 0
    loop: start=0, step=1, limit=10
    $region2: #{tpu_custom_call.1} parent=1 // loop_pre_header
      _
    $region3: #{tpu_custom_call.1} parent=1 // loop_header
      %s19 = sphi 0, %s23
      %p20 = scmp.ge.s32.totalorder %s19, 10
      %s26 = sphi 0, %s38
      %s27 = sphi 0, %s34
      %s28 = sphi 0, %s26
      %s29 = sphi 0, %s27
      %s30 = sphi 0, %s28
      %s31 = sphi 0, %s29
      %s43 = sphi 0, %s45
      %s46 = sphi 0, %s43
      %s47 = sphi 0, %s46
      %s63 = sphi 0, %s47
      %s67 = sphi 0, %s67
      %s69 = sphi 0, %s67
      %s70 = sphi 0, %s69
      %s84 = sphi 0, %s70
      %s88 = sphi 0, %s88
      %s90 = sphi 0, %s88
      %s91 = sphi 0, %s90
      %s105 = sphi 0, %s91
      %s109 = sphi 0, %s109
      %s111 = sphi 0, %s109
      %s112 = sphi 0, %s111
      %s126 = sphi 0, %s112
      %s130 = sphi 0, %s130
      %s132 = sphi 0, %s130
      %s133 = sphi 0, %s132
      %s147 = sphi 0, %s133
      %s153 = sphi 0, %s155
      %s156 = sphi 0, %s153
      %s157 = sphi 0, %s156
      %s173 = sphi 0, %s157
    $region4: #{tpu_custom_call.1} parent=1 // loop_header_branch
      %22 = sbr.rel (%p20) target = $region8
    $region5: #{tpu_custom_call.1} parent=1 // loop_body
      %s24 = ssub.s32 %s19, 1
      %s25 = ssub.s32 %s19, 2
      %s32 = sadd.s32 1, %s27
      %p33 = scmp.ge.s32.totalorder %s32, 2
      %s34 = scalar_select %p33, 0, %s32
      %s35 = sadd.s32 1, %s26
      %s36 = scalar_select %p33, %s35, %s26
      %p37 = scmp.ge.s32.totalorder %s36, 4
      %s38 = scalar_select %p37, 0, %s36
      %s39 = ssub.s32 %s26, %s38
      %s40 = ssub.s32 %s27, %s34
      %s41 = sor.u32 %s39, %s40
      %p42 = scmp.eq.s32.totalorder %s41, 0
      %s44 = sadd.s32 %s43, 1
      %s45 = scalar_select %p42, %s43, %s44
      %p48 = pneg %p42
      %p49 = scmp.eq.s32.totalorder %s19, 7
      %p50 = por %p48, %p49
      %p51 = scmp.ne.s32.totalorder %s43, %s46
      %p52 = scmp.eq.s32.totalorder %s19, 0
      %p53 = por %p51, %p52
      %p54 = scmp.ne.s32.totalorder %s43, %s46
      %p55 = scmp.eq.s32.totalorder %s24, 7
      %p56 = por %p54, %p55
      %p57 = scmp.ne.s32.totalorder %s46, %s47
      %p58 = scmp.eq.s32.totalorder %s24, 0
      %p59 = por %p57, %p58
      %p60 = scmp.ne.s32.totalorder %s46, %s47
      %p61 = scmp.eq.s32.totalorder %s25, 7
      %p62 = por %p60, %p61
      %p64 = scmp.ne.s32.totalorder %s47, %s63
      %p65 = scmp.eq.s32.totalorder %s25, 0
      %p66 = por %p64, %p65
      %s68 = sadd.s32 %s67, 1
      %p71 = scmp.eq.s32.totalorder %s19, 7
      %p72 = scmp.ne.s32.totalorder %s67, %s69
      %p73 = scmp.eq.s32.totalorder %s19, 0
      %p74 = por %p72, %p73
      %p75 = scmp.ne.s32.totalorder %s67, %s69
      %p76 = scmp.eq.s32.totalorder %s24, 7
      %p77 = por %p75, %p76
      %p78 = scmp.ne.s32.totalorder %s69, %s70
      %p79 = scmp.eq.s32.totalorder %s24, 0
      %p80 = por %p78, %p79
      %p81 = scmp.ne.s32.totalorder %s69, %s70
      %p82 = scmp.eq.s32.totalorder %s25, 7
      %p83 = por %p81, %p82
      %p85 = scmp.ne.s32.totalorder %s70, %s84
      %p86 = scmp.eq.s32.totalorder %s25, 0
      %p87 = por %p85, %p86
      %s89 = sadd.s32 %s88, 1
      %p92 = scmp.eq.s32.totalorder %s19, 7
      %p93 = scmp.ne.s32.totalorder %s88, %s90
      %p94 = scmp.eq.s32.totalorder %s19, 0
      %p95 = por %p93, %p94
      %p96 = scmp.ne.s32.totalorder %s88, %s90
      %p97 = scmp.eq.s32.totalorder %s24, 7
      %p98 = por %p96, %p97
      %p99 = scmp.ne.s32.totalorder %s90, %s91
      %p100 = scmp.eq.s32.totalorder %s24, 0
      %p101 = por %p99, %p100
      %p102 = scmp.ne.s32.totalorder %s90, %s91
      %p103 = scmp.eq.s32.totalorder %s25, 7
      %p104 = por %p102, %p103
      %p106 = scmp.ne.s32.totalorder %s91, %s105
      %p107 = scmp.eq.s32.totalorder %s25, 0
      %p108 = por %p106, %p107
      %s110 = sadd.s32 %s109, 1
      %p113 = scmp.eq.s32.totalorder %s19, 7
      %p114 = scmp.ne.s32.totalorder %s109, %s111
      %p115 = scmp.eq.s32.totalorder %s19, 0
      %p116 = por %p114, %p115
      %p117 = scmp.ne.s32.totalorder %s109, %s111
      %p118 = scmp.eq.s32.totalorder %s24, 7
      %p119 = por %p117, %p118
      %p120 = scmp.ne.s32.totalorder %s111, %s112
      %p121 = scmp.eq.s32.totalorder %s24, 0
      %p122 = por %p120, %p121
      %p123 = scmp.ne.s32.totalorder %s111, %s112
      %p124 = scmp.eq.s32.totalorder %s25, 7
      %p125 = por %p123, %p124
      %p127 = scmp.ne.s32.totalorder %s112, %s126
      %p128 = scmp.eq.s32.totalorder %s25, 0
      %p129 = por %p127, %p128
      %s131 = sadd.s32 %s130, 1
      %p134 = scmp.eq.s32.totalorder %s19, 7
      %p135 = scmp.ne.s32.totalorder %s130, %s132
      %p136 = scmp.eq.s32.totalorder %s19, 0
      %p137 = por %p135, %p136
      %p138 = scmp.ne.s32.totalorder %s130, %s132
      %p139 = scmp.eq.s32.totalorder %s24, 7
      %p140 = por %p138, %p139
      %p141 = scmp.ne.s32.totalorder %s132, %s133
      %p142 = scmp.eq.s32.totalorder %s24, 0
      %p143 = por %p141, %p142
      %p144 = scmp.ne.s32.totalorder %s132, %s133
      %p145 = scmp.eq.s32.totalorder %s25, 7
      %p146 = por %p144, %p145
      %p148 = scmp.ne.s32.totalorder %s133, %s147
      %p149 = scmp.eq.s32.totalorder %s25, 0
      %p150 = por %p148, %p149
      %s151 = ssub.s32 %s26, %s38
      %p152 = scmp.eq.s32.totalorder %s151, 0
      %s154 = sadd.s32 %s153, 1
      %s155 = scalar_select %p152, %s153, %s154
      %p158 = pneg %p152
      %p159 = scmp.eq.s32.totalorder %s19, 7
      %p160 = por %p158, %p159
      %p161 = scmp.ne.s32.totalorder %s153, %s156
      %p162 = scmp.eq.s32.totalorder %s19, 0
      %p163 = por %p161, %p162
      %p164 = scmp.ne.s32.totalorder %s153, %s156
      %p165 = scmp.eq.s32.totalorder %s24, 7
      %p166 = por %p164, %p165
      %p167 = scmp.ne.s32.totalorder %s156, %s157
      %p168 = scmp.eq.s32.totalorder %s24, 0
      %p169 = por %p167, %p168
      %p170 = scmp.ne.s32.totalorder %s156, %s157
      %p171 = scmp.eq.s32.totalorder %s25, 7
      %p172 = por %p170, %p171
      %p174 = scmp.ne.s32.totalorder %s157, %s173
      %p175 = scmp.eq.s32.totalorder %s25, 0
      %p176 = por %p174, %p175
      %p177 = scmp.le.s32.totalorder 1, %s19
      %p178 = scmp.lt.s32.totalorder %s19, 9
      %p179 = pnand %p177, %p178
      %p180 = pneg %p179
      // Predicated region
      $region9: #{tpu_custom_call.1} parent=5 // pred_check
        _
      $region10: #{tpu_custom_call.1} parent=5 // pred_check_branch
        %182 = sbr.rel (%p179) target = $region12
      $region11: #{tpu_custom_call.1} parent=5 // pred_region
        %s183 = ssub.s32 %s19, 1
        // Predicated region
        $region13: #{tpu_custom_call.1} parent=11 // pred_check
          %p184 = pneg %p80
        $region14: #{tpu_custom_call.1} parent=11 // pred_check_branch
          %186 = sbr.rel (%p184) target = $region16
        $region15: #{tpu_custom_call.1} parent=11 // pred_region
          %s188 = ssub.s32 8192, 8192
          %189 = vsyncadd [#allocation7], %s188
          %s190 = sshll.u32 [#allocation6], 4
          %s191 = int_to_ptr.vmem [resolvable:$true] %s190
          %196 = dma.hbm_to_vmem [thread:$0]  %s1, 8192, %s191, [#allocation7], 64, 64, 4
        $region16: #{tpu_custom_call.1} parent=11 // pred_fallthru
          _
        // Predicated region
        $region17: #{tpu_custom_call.1} parent=11 // pred_check
          %p197 = pneg %p101
        $region18: #{tpu_custom_call.1} parent=11 // pred_check_branch
          %199 = sbr.rel (%p197) target = $region20
        $region19: #{tpu_custom_call.1} parent=11 // pred_region
          %s201 = ssub.s32 1024, 1024
          %202 = vsyncadd [#allocation7], %s201
          %s203 = sshll.u32 [#allocation8], 4
          %s204 = int_to_ptr.vmem [resolvable:$true] %s203
          %209 = dma.hbm_to_vmem [thread:$0]  %s2, 1024, %s204, [#allocation7], 64, 64, 4
        $region20: #{tpu_custom_call.1} parent=11 // pred_fallthru
          _
        // Predicated region
        $region21: #{tpu_custom_call.1} parent=11 // pred_check
          %p210 = pneg %p122
        $region22: #{tpu_custom_call.1} parent=11 // pred_check_branch
          %212 = sbr.rel (%p210) target = $region24
        $region23: #{tpu_custom_call.1} parent=11 // pred_region
          %s214 = ssub.s32 16, 16
          %215 = vsyncadd [#allocation10], %s214
          %s217 = sshll.u32 [#allocation9], 4
          %s218 = int_to_ptr.vmem [resolvable:$true] %s217
          %220 = dma.hbm_to_vmem [thread:$0]  %s3, 16, %s218, [#allocation10]
        $region24: #{tpu_custom_call.1} parent=11 // pred_fallthru
          _
        // Predicated region
        $region25: #{tpu_custom_call.1} parent=11 // pred_check
          %p221 = pneg %p143
        $region26: #{tpu_custom_call.1} parent=11 // pred_check_branch
          %223 = sbr.rel (%p221) target = $region28
        $region27: #{tpu_custom_call.1} parent=11 // pred_region
          %s225 = ssub.s32 1024, 1024
          %226 = vsyncadd [#allocation10], %s225
          %s227 = sshll.u32 [#allocation11], 4
          %s228 = int_to_ptr.vmem [resolvable:$true] %s227
          %233 = dma.hbm_to_vmem [thread:$0]  %s4, 1024, %s228, [#allocation10], 64, 64, 4
        $region28: #{tpu_custom_call.1} parent=11 // pred_fallthru
          _
      $region12: #{tpu_custom_call.1} parent=5 // pred_fallthru
        _
      %p234 = scmp.lt.s32.totalorder %s19, 8
      // Predicated region
      $region29: #{tpu_custom_call.1} parent=5 // pred_check
        %p235 = pneg %p234
      $region30: #{tpu_custom_call.1} parent=5 // pred_check_branch
        %237 = sbr.rel (%p235) target = $region32
      $region31: #{tpu_custom_call.1} parent=5 // pred_region
        // Predicated region
        $region33: #{tpu_custom_call.1} parent=31 // pred_check
          %p238 = pneg %p53
        $region34: #{tpu_custom_call.1} parent=31 // pred_check_branch
          %240 = sbr.rel (%p238) target = $region36
        $region35: #{tpu_custom_call.1} parent=31 // pred_region
          %s241 = sand.u32 %s43, 1
          %s242 = scalar_lea.sflag [#allocation4], %s241
          %s243 = sand.u32 %s43, 1
          %s244 = smul.addr %s243, 512
          %s245 = scalar_lea.vmem [#allocation3], %s244
          %s246 = smul.u32 32, %s26
          %s247 = smul.u32 4, %s27
          %s249 = ssub.s32 8192, 8192
          %250 = vsyncadd %s242, %s249
          %s251 = smul.addr %s246, 8
          %s252 = sadd.s32 %s247, %s251
          %s253 = smul.addr %s252, 64
          %s254 = scalar_lea.hbm %s0, %s253
          %s255 = sshll.u32 %s245, 4
          %s256 = int_to_ptr.vmem [resolvable:$true] %s255
          %261 = dma.hbm_to_vmem [thread:$0]  %s254, 8192, %s256, %s242, 512, 256, 16
        $region36: #{tpu_custom_call.1} parent=31 // pred_fallthru
          _
      $region32: #{tpu_custom_call.1} parent=5 // pred_fallthru
        _
      %p262 = scmp.le.s32.totalorder 1, %s19
      %p263 = scmp.lt.s32.totalorder %s19, 9
      %p264 = pnand %p262, %p263
      %p265 = pneg %p264
      // Predicated region
      $region37: #{tpu_custom_call.1} parent=5 // pred_check
        _
      $region38: #{tpu_custom_call.1} parent=5 // pred_check_branch
        %267 = sbr.rel (%p264) target = $region40
      $region39: #{tpu_custom_call.1} parent=5 // pred_region
        %s268 = ssub.s32 %s19, 1
        %s269 = sand.u32 %s46, 1
        %s270 = scalar_lea.sflag [#allocation4], %s269
        %s271 = sand.u32 %s46, 1
        %s272 = smul.addr %s271, 512
        %s273 = scalar_lea.vmem [#allocation3], %s272
        // Predicated region
        $region41: #{tpu_custom_call.1} parent=39 // pred_check
          %p274 = pneg %p59
        $region42: #{tpu_custom_call.1} parent=39 // pred_check_branch
          %276 = sbr.rel (%p274) target = $region44
        $region43: #{tpu_custom_call.1} parent=39 // pred_region
          %277 = dma.done %s270, 8192
        $region44: #{tpu_custom_call.1} parent=39 // pred_fallthru
          _
        // Predicated region
        $region45: #{tpu_custom_call.1} parent=39 // pred_check
          %p278 = pneg %p80
        $region46: #{tpu_custom_call.1} parent=39 // pred_check_branch
          %280 = sbr.rel (%p278) target = $region48
        $region47: #{tpu_custom_call.1} parent=39 // pred_region
          %281 = dma.done [#allocation7], 8192
        $region48: #{tpu_custom_call.1} parent=39 // pred_fallthru
          _
        // Predicated region
        $region49: #{tpu_custom_call.1} parent=39 // pred_check
          %p282 = pneg %p101
        $region50: #{tpu_custom_call.1} parent=39 // pred_check_branch
          %284 = sbr.rel (%p282) target = $region52
        $region51: #{tpu_custom_call.1} parent=39 // pred_region
          %285 = dma.done [#allocation7], 1024
        $region52: #{tpu_custom_call.1} parent=39 // pred_fallthru
          _
        // Predicated region
        $region53: #{tpu_custom_call.1} parent=39 // pred_check
          %p286 = pneg %p122
        $region54: #{tpu_custom_call.1} parent=39 // pred_check_branch
          %288 = sbr.rel (%p286) target = $region56
        $region55: #{tpu_custom_call.1} parent=39 // pred_region
          %289 = dma.done [#allocation10], 16
        $region56: #{tpu_custom_call.1} parent=39 // pred_fallthru
          _
        // Predicated region
        $region57: #{tpu_custom_call.1} parent=39 // pred_check
          %p290 = pneg %p143
        $region58: #{tpu_custom_call.1} parent=39 // pred_check_branch
          %292 = sbr.rel (%p290) target = $region60
        $region59: #{tpu_custom_call.1} parent=39 // pred_region
          %293 = dma.done [#allocation10], 1024
        $region60: #{tpu_custom_call.1} parent=39 // pred_fallthru
          _
        %s294 = sand.u32 %s46, 1
        %s295 = scalar_lea.sflag [#allocation4], %s294
        %s296 = sand.u32 %s46, 1
        %s297 = smul.addr %s296, 512
        %s298 = scalar_lea.vmem [#allocation3], %s297
        %p299 = pneg %p59
        %p300 = pneg %p56
        %p301 = pneg %p80
        %p302 = pneg %p77
        %p303 = pneg %p101
        %p304 = pneg %p98
        %p305 = pneg %p122
        %p306 = pneg %p119
        %p307 = pneg %p143
        %p308 = pneg %p140
        %p309 = pneg %p169
        %p310 = pneg %p166
        %s311 = sand.u32 %s156, 1
        %s312 = scalar_lea.sflag [#allocation5], %s311
        %s313 = sand.u32 %s156, 1
        %s314 = smul.addr %s313, 128
        %s315 = scalar_lea.vmem [#allocation12], %s314
        %s316 = smul.u32 32, %s28
        %s317 = smul.u32 4, %s29
        %s318 = smul.u32 32, %s28
        %p320 = scmp.eq.s32.totalorder %s29, 0
        // Predicated region
        $region61: #{tpu_custom_call.1} parent=39 // pred_check
          %p321 = pneg %p320
        $region62: #{tpu_custom_call.1} parent=39 // pred_check_branch
          %323 = sbr.rel (%p321) target = $region64
        $region63: #{tpu_custom_call.1} parent=39 // pred_region
          %324 = vst [vmem:[#allocation2] sm:$0xff] 0.0
          %325 = vst [vmem:[#allocation2 + $0x8] sm:$0xff] 0.0
          %326 = vst [vmem:[#allocation2 + $0x10] sm:$0xff] 0.0
          %327 = vst [vmem:[#allocation2 + $0x18] sm:$0xff] 0.0
          %328 = vst [vmem:[#allocation2 + $0x20] sm:$0xff] 0.0
          %329 = vst [vmem:[#allocation2 + $0x28] sm:$0xff] 0.0
          %330 = vst [vmem:[#allocation2 + $0x30] sm:$0xff] 0.0
          %331 = vst [vmem:[#allocation2 + $0x38] sm:$0xff] 0.0
          %332 = vst [vmem:[#allocation2 + $0x40] sm:$0xff] 0.0
          %333 = vst [vmem:[#allocation2 + $0x48] sm:$0xff] 0.0
          %334 = vst [vmem:[#allocation2 + $0x50] sm:$0xff] 0.0
          %335 = vst [vmem:[#allocation2 + $0x58] sm:$0xff] 0.0
          %336 = vst [vmem:[#allocation2 + $0x60] sm:$0xff] 0.0
          %337 = vst [vmem:[#allocation2 + $0x68] sm:$0xff] 0.0
          %338 = vst [vmem:[#allocation2 + $0x70] sm:$0xff] 0.0
          %339 = vst [vmem:[#allocation2 + $0x78] sm:$0xff] 0.0
          %340 = vst [vmem:[#allocation2 + $0x80] sm:$0xff] 0.0
          %341 = vst [vmem:[#allocation2 + $0x88] sm:$0xff] 0.0
          %342 = vst [vmem:[#allocation2 + $0x90] sm:$0xff] 0.0
          %343 = vst [vmem:[#allocation2 + $0x98] sm:$0xff] 0.0
          %344 = vst [vmem:[#allocation2 + $0xa0] sm:$0xff] 0.0
          %345 = vst [vmem:[#allocation2 + $0xa8] sm:$0xff] 0.0
          %346 = vst [vmem:[#allocation2 + $0xb0] sm:$0xff] 0.0
          %347 = vst [vmem:[#allocation2 + $0xb8] sm:$0xff] 0.0
          %348 = vst [vmem:[#allocation2 + $0xc0] sm:$0xff] 0.0
          %349 = vst [vmem:[#allocation2 + $0xc8] sm:$0xff] 0.0
          %350 = vst [vmem:[#allocation2 + $0xd0] sm:$0xff] 0.0
          %351 = vst [vmem:[#allocation2 + $0xd8] sm:$0xff] 0.0
          %352 = vst [vmem:[#allocation2 + $0xe0] sm:$0xff] 0.0
          %353 = vst [vmem:[#allocation2 + $0xe8] sm:$0xff] 0.0
          %354 = vst [vmem:[#allocation2 + $0xf0] sm:$0xff] 0.0
          %355 = vst [vmem:[#allocation2 + $0xf8] sm:$0xff] 0.0
        $region64: #{tpu_custom_call.1} parent=39 // pred_fallthru
          _
        %s356 = smul.u32 %s29, 512
        %v357 = vld [vmem:[#allocation2] sm:$0xff]
        %v358 = vld [vmem:[#allocation2 + $0x8] sm:$0xff]
        %v359 = vld [vmem:[#allocation2 + $0x10] sm:$0xff]
        %v360 = vld [vmem:[#allocation2 + $0x18] sm:$0xff]
        %v361 = vld [vmem:[#allocation2 + $0x20] sm:$0xff]
        %v362 = vld [vmem:[#allocation2 + $0x28] sm:$0xff]
        %v363 = vld [vmem:[#allocation2 + $0x30] sm:$0xff]
        %v364 = vld [vmem:[#allocation2 + $0x38] sm:$0xff]
        %v365 = vld [vmem:[#allocation2 + $0x40] sm:$0xff]
        %v366 = vld [vmem:[#allocation2 + $0x48] sm:$0xff]
        %v367 = vld [vmem:[#allocation2 + $0x50] sm:$0xff]
        %v368 = vld [vmem:[#allocation2 + $0x58] sm:$0xff]
        %v369 = vld [vmem:[#allocation2 + $0x60] sm:$0xff]
        %v370 = vld [vmem:[#allocation2 + $0x68] sm:$0xff]
        %v371 = vld [vmem:[#allocation2 + $0x70] sm:$0xff]
        %v372 = vld [vmem:[#allocation2 + $0x78] sm:$0xff]
        %v373 = vld [vmem:[#allocation2 + $0x80] sm:$0xff]
        %v374 = vld [vmem:[#allocation2 + $0x88] sm:$0xff]
        %v375 = vld [vmem:[#allocation2 + $0x90] sm:$0xff]
        %v376 = vld [vmem:[#allocation2 + $0x98] sm:$0xff]
        %v377 = vld [vmem:[#allocation2 + $0xa0] sm:$0xff]
        %v378 = vld [vmem:[#allocation2 + $0xa8] sm:$0xff]
        %v379 = vld [vmem:[#allocation2 + $0xb0] sm:$0xff]
        %v380 = vld [vmem:[#allocation2 + $0xb8] sm:$0xff]
        %v381 = vld [vmem:[#allocation2 + $0xc0] sm:$0xff]
        %v382 = vld [vmem:[#allocation2 + $0xc8] sm:$0xff]
        %v383 = vld [vmem:[#allocation2 + $0xd0] sm:$0xff]
        %v384 = vld [vmem:[#allocation2 + $0xd8] sm:$0xff]
        %v385 = vld [vmem:[#allocation2 + $0xe0] sm:$0xff]
        %v386 = vld [vmem:[#allocation2 + $0xe8] sm:$0xff]
        %v387 = vld [vmem:[#allocation2 + $0xf0] sm:$0xff]
        %v388 = vld [vmem:[#allocation2 + $0xf8] sm:$0xff]
        %v389 = vld [vmem:[%s273] sm:$0xff]
        %v390 = vld [vmem:[%s273 + $0x8] sm:$0xff]
        %v391 = vld [vmem:[%s273 + $0x10] sm:$0xff]
        %v392 = vld [vmem:[%s273 + $0x18] sm:$0xff]
        %v393 = vld [vmem:[%s273 + $0x20] sm:$0xff]
        %v394 = vld [vmem:[%s273 + $0x28] sm:$0xff]
        %v395 = vld [vmem:[%s273 + $0x30] sm:$0xff]
        %v396 = vld [vmem:[%s273 + $0x38] sm:$0xff]
        %v397 = vld [vmem:[%s273 + $0x40] sm:$0xff]
        %v398 = vld [vmem:[%s273 + $0x48] sm:$0xff]
        %v399 = vld [vmem:[%s273 + $0x50] sm:$0xff]
        %v400 = vld [vmem:[%s273 + $0x58] sm:$0xff]
        %v401 = vld [vmem:[%s273 + $0x60] sm:$0xff]
        %v402 = vld [vmem:[%s273 + $0x68] sm:$0xff]
        %v403 = vld [vmem:[%s273 + $0x70] sm:$0xff]
        %v404 = vld [vmem:[%s273 + $0x78] sm:$0xff]
        %v405 = vld [vmem:[%s273 + $0x80] sm:$0xff]
        %v406 = vld [vmem:[%s273 + $0x88] sm:$0xff]
        %v407 = vld [vmem:[%s273 + $0x90] sm:$0xff]
        %v408 = vld [vmem:[%s273 + $0x98] sm:$0xff]
        %v409 = vld [vmem:[%s273 + $0xa0] sm:$0xff]
        %v410 = vld [vmem:[%s273 + $0xa8] sm:$0xff]
        %v411 = vld [vmem:[%s273 + $0xb0] sm:$0xff]
        %v412 = vld [vmem:[%s273 + $0xb8] sm:$0xff]
        %v413 = vld [vmem:[%s273 + $0xc0] sm:$0xff]
        %v414 = vld [vmem:[%s273 + $0xc8] sm:$0xff]
        %v415 = vld [vmem:[%s273 + $0xd0] sm:$0xff]
        %v416 = vld [vmem:[%s273 + $0xd8] sm:$0xff]
        %v417 = vld [vmem:[%s273 + $0xe0] sm:$0xff]
        %v418 = vld [vmem:[%s273 + $0xe8] sm:$0xff]
        %v419 = vld [vmem:[%s273 + $0xf0] sm:$0xff]
        %v420 = vld [vmem:[%s273 + $0xf8] sm:$0xff]
        %v421 = vld [vmem:[%s273 + $0x100] sm:$0xff]
        %v422 = vld [vmem:[%s273 + $0x108] sm:$0xff]
        %v423 = vld [vmem:[%s273 + $0x110] sm:$0xff]
        %v424 = vld [vmem:[%s273 + $0x118] sm:$0xff]
        %v425 = vld [vmem:[%s273 + $0x120] sm:$0xff]
        %v426 = vld [vmem:[%s273 + $0x128] sm:$0xff]
        %v427 = vld [vmem:[%s273 + $0x130] sm:$0xff]
        %v428 = vld [vmem:[%s273 + $0x138] sm:$0xff]
        %v429 = vld [vmem:[%s273 + $0x140] sm:$0xff]
        %v430 = vld [vmem:[%s273 + $0x148] sm:$0xff]
        %v431 = vld [vmem:[%s273 + $0x150] sm:$0xff]
        %v432 = vld [vmem:[%s273 + $0x158] sm:$0xff]
        %v433 = vld [vmem:[%s273 + $0x160] sm:$0xff]
        %v434 = vld [vmem:[%s273 + $0x168] sm:$0xff]
        %v435 = vld [vmem:[%s273 + $0x170] sm:$0xff]
        %v436 = vld [vmem:[%s273 + $0x178] sm:$0xff]
        %v437 = vld [vmem:[%s273 + $0x180] sm:$0xff]
        %v438 = vld [vmem:[%s273 + $0x188] sm:$0xff]
        %v439 = vld [vmem:[%s273 + $0x190] sm:$0xff]
        %v440 = vld [vmem:[%s273 + $0x198] sm:$0xff]
        %v441 = vld [vmem:[%s273 + $0x1a0] sm:$0xff]
        %v442 = vld [vmem:[%s273 + $0x1a8] sm:$0xff]
        %v443 = vld [vmem:[%s273 + $0x1b0] sm:$0xff]
        %v444 = vld [vmem:[%s273 + $0x1b8] sm:$0xff]
        %v445 = vld [vmem:[%s273 + $0x1c0] sm:$0xff]
        %v446 = vld [vmem:[%s273 + $0x1c8] sm:$0xff]
        %v447 = vld [vmem:[%s273 + $0x1d0] sm:$0xff]
        %v448 = vld [vmem:[%s273 + $0x1d8] sm:$0xff]
        %v449 = vld [vmem:[%s273 + $0x1e0] sm:$0xff]
        %v450 = vld [vmem:[%s273 + $0x1e8] sm:$0xff]
        %v451 = vld [vmem:[%s273 + $0x1f0] sm:$0xff]
        %v452 = vld [vmem:[%s273 + $0x1f8] sm:$0xff]
        %s453 = sshra.s32 %s356, 3
        %s454 = sand.u32 %s356, 7
        %s455 = smul.addr %s453, 4
        %s456 = scalar_lea.vmem [#allocation6], %s455
        %v457 = vld [vmem:[%s456] sm:$0xf]
        %v458 = vld [vmem:[%s456 + $0x4] sm:$0xf]
        %v459 = vld [vmem:[%s456 + $0x8] sm:$0xf]
        %v460 = vld [vmem:[%s456 + $0xc] sm:$0xf]
        %v461 = vld [vmem:[%s456 + $0x10] sm:$0xf]
        %v462 = vld [vmem:[%s456 + $0x14] sm:$0xf]
        %v463 = vld [vmem:[%s456 + $0x18] sm:$0xf]
        %v464 = vld [vmem:[%s456 + $0x1c] sm:$0xf]
        %v465 = vld [vmem:[%s456 + $0x20] sm:$0xf]
        %v466 = vld [vmem:[%s456 + $0x24] sm:$0xf]
        %v467 = vld [vmem:[%s456 + $0x28] sm:$0xf]
        %v468 = vld [vmem:[%s456 + $0x2c] sm:$0xf]
        %v469 = vld [vmem:[%s456 + $0x30] sm:$0xf]
        %v470 = vld [vmem:[%s456 + $0x34] sm:$0xf]
        %v471 = vld [vmem:[%s456 + $0x38] sm:$0xf]
        %v472 = vld [vmem:[%s456 + $0x3c] sm:$0xf]
        %v473 = vld [vmem:[%s456 + $0x40] sm:$0xf]
        %v474 = vld [vmem:[%s456 + $0x44] sm:$0xf]
        %v475 = vld [vmem:[%s456 + $0x48] sm:$0xf]
        %v476 = vld [vmem:[%s456 + $0x4c] sm:$0xf]
        %v477 = vld [vmem:[%s456 + $0x50] sm:$0xf]
        %v478 = vld [vmem:[%s456 + $0x54] sm:$0xf]
        %v479 = vld [vmem:[%s456 + $0x58] sm:$0xf]
        %v480 = vld [vmem:[%s456 + $0x5c] sm:$0xf]
        %v481 = vld [vmem:[%s456 + $0x60] sm:$0xf]
        %v482 = vld [vmem:[%s456 + $0x64] sm:$0xf]
        %v483 = vld [vmem:[%s456 + $0x68] sm:$0xf]
        %v484 = vld [vmem:[%s456 + $0x6c] sm:$0xf]
        %v485 = vld [vmem:[%s456 + $0x70] sm:$0xf]
        %v486 = vld [vmem:[%s456 + $0x74] sm:$0xf]
        %v487 = vld [vmem:[%s456 + $0x78] sm:$0xf]
        %v488 = vld [vmem:[%s456 + $0x7c] sm:$0xf]
        %v489 = vld [vmem:[%s456 + $0x80] sm:$0xf]
        %v490 = vld [vmem:[%s456 + $0x84] sm:$0xf]
        %v491 = vld [vmem:[%s456 + $0x88] sm:$0xf]
        %v492 = vld [vmem:[%s456 + $0x8c] sm:$0xf]
        %v493 = vld [vmem:[%s456 + $0x90] sm:$0xf]
        %v494 = vld [vmem:[%s456 + $0x94] sm:$0xf]
        %v495 = vld [vmem:[%s456 + $0x98] sm:$0xf]
        %v496 = vld [vmem:[%s456 + $0x9c] sm:$0xf]
        %v497 = vld [vmem:[%s456 + $0xa0] sm:$0xf]
        %v498 = vld [vmem:[%s456 + $0xa4] sm:$0xf]
        %v499 = vld [vmem:[%s456 + $0xa8] sm:$0xf]
        %v500 = vld [vmem:[%s456 + $0xac] sm:$0xf]
        %v501 = vld [vmem:[%s456 + $0xb0] sm:$0xf]
        %v502 = vld [vmem:[%s456 + $0xb4] sm:$0xf]
        %v503 = vld [vmem:[%s456 + $0xb8] sm:$0xf]
        %v504 = vld [vmem:[%s456 + $0xbc] sm:$0xf]
        %v505 = vld [vmem:[%s456 + $0xc0] sm:$0xf]
        %v506 = vld [vmem:[%s456 + $0xc4] sm:$0xf]
        %v507 = vld [vmem:[%s456 + $0xc8] sm:$0xf]
        %v508 = vld [vmem:[%s456 + $0xcc] sm:$0xf]
        %v509 = vld [vmem:[%s456 + $0xd0] sm:$0xf]
        %v510 = vld [vmem:[%s456 + $0xd4] sm:$0xf]
        %v511 = vld [vmem:[%s456 + $0xd8] sm:$0xf]
        %v512 = vld [vmem:[%s456 + $0xdc] sm:$0xf]
        %v513 = vld [vmem:[%s456 + $0xe0] sm:$0xf]
        %v514 = vld [vmem:[%s456 + $0xe4] sm:$0xf]
        %v515 = vld [vmem:[%s456 + $0xe8] sm:$0xf]
        %v516 = vld [vmem:[%s456 + $0xec] sm:$0xf]
        %v517 = vld [vmem:[%s456 + $0xf0] sm:$0xf]
        %v518 = vld [vmem:[%s456 + $0xf4] sm:$0xf]
        %v519 = vld [vmem:[%s456 + $0xf8] sm:$0xf]
        %v520 = vld [vmem:[%s456 + $0xfc] sm:$0xf]
        %v585 = vunpack.c.l.b16 %v389
        %v586 = vunpack.c.h.b16 %v389
        %v587 = vunpack.c.l.b16 %v390
        %v588 = vunpack.c.h.b16 %v390
        %v589 = vunpack.c.l.b16 %v391
        %v590 = vunpack.c.h.b16 %v391
        %v591 = vunpack.c.l.b16 %v392
        %v592 = vunpack.c.h.b16 %v392
        %v593 = vunpack.c.l.b16 %v393
        %v594 = vunpack.c.h.b16 %v393
        %v595 = vunpack.c.l.b16 %v394
        %v596 = vunpack.c.h.b16 %v394
        %v597 = vunpack.c.l.b16 %v395
        %v598 = vunpack.c.h.b16 %v395
        %v599 = vunpack.c.l.b16 %v396
        %v600 = vunpack.c.h.b16 %v396
        %v601 = vunpack.c.l.b16 %v397
        %v602 = vunpack.c.h.b16 %v397
        %v603 = vunpack.c.l.b16 %v398
        %v604 = vunpack.c.h.b16 %v398
        %v605 = vunpack.c.l.b16 %v399
        %v606 = vunpack.c.h.b16 %v399
        %v607 = vunpack.c.l.b16 %v400
        %v608 = vunpack.c.h.b16 %v400
        %v609 = vunpack.c.l.b16 %v401
        %v610 = vunpack.c.h.b16 %v401
        %v611 = vunpack.c.l.b16 %v402
        %v612 = vunpack.c.h.b16 %v402
        %v613 = vunpack.c.l.b16 %v403
        %v614 = vunpack.c.h.b16 %v403
        %v615 = vunpack.c.l.b16 %v404
        %v616 = vunpack.c.h.b16 %v404
        %v617 = vunpack.c.l.b16 %v405
        %v618 = vunpack.c.h.b16 %v405
        %v619 = vunpack.c.l.b16 %v406
        %v620 = vunpack.c.h.b16 %v406
        %v621 = vunpack.c.l.b16 %v407
        %v622 = vunpack.c.h.b16 %v407
        %v623 = vunpack.c.l.b16 %v408
        %v624 = vunpack.c.h.b16 %v408
        %v625 = vunpack.c.l.b16 %v409
        %v626 = vunpack.c.h.b16 %v409
        %v627 = vunpack.c.l.b16 %v410
        %v628 = vunpack.c.h.b16 %v410
        %v629 = vunpack.c.l.b16 %v411
        %v630 = vunpack.c.h.b16 %v411
        %v631 = vunpack.c.l.b16 %v412
        %v632 = vunpack.c.h.b16 %v412
        %v633 = vunpack.c.l.b16 %v413
        %v634 = vunpack.c.h.b16 %v413
        %v635 = vunpack.c.l.b16 %v414
        %v636 = vunpack.c.h.b16 %v414
        %v637 = vunpack.c.l.b16 %v415
        %v638 = vunpack.c.h.b16 %v415
        %v639 = vunpack.c.l.b16 %v416
        %v640 = vunpack.c.h.b16 %v416
        %v641 = vunpack.c.l.b16 %v417
        %v642 = vunpack.c.h.b16 %v417
        %v643 = vunpack.c.l.b16 %v418
        %v644 = vunpack.c.h.b16 %v418
        %v645 = vunpack.c.l.b16 %v419
        %v646 = vunpack.c.h.b16 %v419
        %v647 = vunpack.c.l.b16 %v420
        %v648 = vunpack.c.h.b16 %v420
        %v649 = vunpack.c.l.b16 %v421
        %v650 = vunpack.c.h.b16 %v421
        %v651 = vunpack.c.l.b16 %v422
        %v652 = vunpack.c.h.b16 %v422
        %v653 = vunpack.c.l.b16 %v423
        %v654 = vunpack.c.h.b16 %v423
        %v655 = vunpack.c.l.b16 %v424
        %v656 = vunpack.c.h.b16 %v424
        %v657 = vunpack.c.l.b16 %v425
        %v658 = vunpack.c.h.b16 %v425
        %v659 = vunpack.c.l.b16 %v426
        %v660 = vunpack.c.h.b16 %v426
        %v661 = vunpack.c.l.b16 %v427
        %v662 = vunpack.c.h.b16 %v427
        %v663 = vunpack.c.l.b16 %v428
        %v664 = vunpack.c.h.b16 %v428
        %v665 = vunpack.c.l.b16 %v429
        %v666 = vunpack.c.h.b16 %v429
        %v667 = vunpack.c.l.b16 %v430
        %v668 = vunpack.c.h.b16 %v430
        %v669 = vunpack.c.l.b16 %v431
        %v670 = vunpack.c.h.b16 %v431
        %v671 = vunpack.c.l.b16 %v432
        %v672 = vunpack.c.h.b16 %v432
        %v673 = vunpack.c.l.b16 %v433
        %v674 = vunpack.c.h.b16 %v433
        %v675 = vunpack.c.l.b16 %v434
        %v676 = vunpack.c.h.b16 %v434
        %v677 = vunpack.c.l.b16 %v435
        %v678 = vunpack.c.h.b16 %v435
        %v679 = vunpack.c.l.b16 %v436
        %v680 = vunpack.c.h.b16 %v436
        %v681 = vunpack.c.l.b16 %v437
        %v682 = vunpack.c.h.b16 %v437
        %v683 = vunpack.c.l.b16 %v438
        %v684 = vunpack.c.h.b16 %v438
        %v685 = vunpack.c.l.b16 %v439
        %v686 = vunpack.c.h.b16 %v439
        %v687 = vunpack.c.l.b16 %v440
        %v688 = vunpack.c.h.b16 %v440
        %v689 = vunpack.c.l.b16 %v441
        %v690 = vunpack.c.h.b16 %v441
        %v691 = vunpack.c.l.b16 %v442
        %v692 = vunpack.c.h.b16 %v442
        %v693 = vunpack.c.l.b16 %v443
        %v694 = vunpack.c.h.b16 %v443
        %v695 = vunpack.c.l.b16 %v444
        %v696 = vunpack.c.h.b16 %v444
        %v697 = vunpack.c.l.b16 %v445
        %v698 = vunpack.c.h.b16 %v445
        %v699 = vunpack.c.l.b16 %v446
        %v700 = vunpack.c.h.b16 %v446
        %v701 = vunpack.c.l.b16 %v447
        %v702 = vunpack.c.h.b16 %v447
        %v703 = vunpack.c.l.b16 %v448
        %v704 = vunpack.c.h.b16 %v448
        %v705 = vunpack.c.l.b16 %v449
        %v706 = vunpack.c.h.b16 %v449
        %v707 = vunpack.c.l.b16 %v450
        %v708 = vunpack.c.h.b16 %v450
        %v709 = vunpack.c.l.b16 %v451
        %v710 = vunpack.c.h.b16 %v451
        %v711 = vunpack.c.l.b16 %v452
        %v712 = vunpack.c.h.b16 %v452
        %v713 = vpack.c.b16 %v589, %v585
        %v714 = vpack.c.b16 %v590, %v586
        %v715 = vpack.c.b16 %v591, %v587
        %v716 = vpack.c.b16 %v592, %v588
        %v717 = vpack.c.b16 %v597, %v593
        %v718 = vpack.c.b16 %v598, %v594
        %v719 = vpack.c.b16 %v599, %v595
        %v720 = vpack.c.b16 %v600, %v596
        %v721 = vpack.c.b16 %v605, %v601
        %v722 = vpack.c.b16 %v606, %v602
        %v723 = vpack.c.b16 %v607, %v603
        %v724 = vpack.c.b16 %v608, %v604
        %v725 = vpack.c.b16 %v613, %v609
        %v726 = vpack.c.b16 %v614, %v610
        %v727 = vpack.c.b16 %v615, %v611
        %v728 = vpack.c.b16 %v616, %v612
        %v729 = vpack.c.b16 %v621, %v617
        %v730 = vpack.c.b16 %v622, %v618
        %v731 = vpack.c.b16 %v623, %v619
        %v732 = vpack.c.b16 %v624, %v620
        %v733 = vpack.c.b16 %v629, %v625
        %v734 = vpack.c.b16 %v630, %v626
        %v735 = vpack.c.b16 %v631, %v627
        %v736 = vpack.c.b16 %v632, %v628
        %v737 = vpack.c.b16 %v637, %v633
        %v738 = vpack.c.b16 %v638, %v634
        %v739 = vpack.c.b16 %v639, %v635
        %v740 = vpack.c.b16 %v640, %v636
        %v741 = vpack.c.b16 %v645, %v641
        %v742 = vpack.c.b16 %v646, %v642
        %v743 = vpack.c.b16 %v647, %v643
        %v744 = vpack.c.b16 %v648, %v644
        %v745 = vpack.c.b16 %v653, %v649
        %v746 = vpack.c.b16 %v654, %v650
        %v747 = vpack.c.b16 %v655, %v651
        %v748 = vpack.c.b16 %v656, %v652
        %v749 = vpack.c.b16 %v661, %v657
        %v750 = vpack.c.b16 %v662, %v658
        %v751 = vpack.c.b16 %v663, %v659
        %v752 = vpack.c.b16 %v664, %v660
        %v753 = vpack.c.b16 %v669, %v665
        %v754 = vpack.c.b16 %v670, %v666
        %v755 = vpack.c.b16 %v671, %v667
        %v756 = vpack.c.b16 %v672, %v668
        %v757 = vpack.c.b16 %v677, %v673
        %v758 = vpack.c.b16 %v678, %v674
        %v759 = vpack.c.b16 %v679, %v675
        %v760 = vpack.c.b16 %v680, %v676
        %v761 = vpack.c.b16 %v685, %v681
        %v762 = vpack.c.b16 %v686, %v682
        %v763 = vpack.c.b16 %v687, %v683
        %v764 = vpack.c.b16 %v688, %v684
        %v765 = vpack.c.b16 %v693, %v689
        %v766 = vpack.c.b16 %v694, %v690
        %v767 = vpack.c.b16 %v695, %v691
        %v768 = vpack.c.b16 %v696, %v692
        %v769 = vpack.c.b16 %v701, %v697
        %v770 = vpack.c.b16 %v702, %v698
        %v771 = vpack.c.b16 %v703, %v699
        %v772 = vpack.c.b16 %v704, %v700
        %v773 = vpack.c.b16 %v709, %v705
        %v774 = vpack.c.b16 %v710, %v706
        %v775 = vpack.c.b16 %v711, %v707
        %v776 = vpack.c.b16 %v712, %v708
        %v905 = vunpack.c.l.b16 %v457
        %v906 = vunpack.c.l.b16 %v458
        %v907 = vunpack.c.l.b16 %v459
        %v908 = vunpack.c.l.b16 %v460
        %v909 = vunpack.c.l.b16 %v461
        %v910 = vunpack.c.l.b16 %v462
        %v911 = vunpack.c.l.b16 %v463
        %v912 = vunpack.c.l.b16 %v464
        %v913 = vunpack.c.l.b16 %v465
        %v914 = vunpack.c.l.b16 %v466
        %v915 = vunpack.c.l.b16 %v467
        %v916 = vunpack.c.l.b16 %v468
        %v917 = vunpack.c.l.b16 %v469
        %v918 = vunpack.c.l.b16 %v470
        %v919 = vunpack.c.l.b16 %v471
        %v920 = vunpack.c.l.b16 %v472
        %v921 = vunpack.c.l.b16 %v473
        %v922 = vunpack.c.l.b16 %v474
        %v923 = vunpack.c.l.b16 %v475
        %v924 = vunpack.c.l.b16 %v476
        %v925 = vunpack.c.l.b16 %v477
        %v926 = vunpack.c.l.b16 %v478
        %v927 = vunpack.c.l.b16 %v479
        %v928 = vunpack.c.l.b16 %v480
        %v929 = vunpack.c.l.b16 %v481
        %v930 = vunpack.c.l.b16 %v482
        %v931 = vunpack.c.l.b16 %v483
        %v932 = vunpack.c.l.b16 %v484
        %v933 = vunpack.c.l.b16 %v485
        %v934 = vunpack.c.l.b16 %v486
        %v935 = vunpack.c.l.b16 %v487
        %v936 = vunpack.c.l.b16 %v488
        %v937 = vunpack.c.l.b16 %v489
        %v938 = vunpack.c.l.b16 %v490
        %v939 = vunpack.c.l.b16 %v491
        %v940 = vunpack.c.l.b16 %v492
        %v941 = vunpack.c.l.b16 %v493
        %v942 = vunpack.c.l.b16 %v494
        %v943 = vunpack.c.l.b16 %v495
        %v944 = vunpack.c.l.b16 %v496
        %v945 = vunpack.c.l.b16 %v497
        %v946 = vunpack.c.l.b16 %v498
        %v947 = vunpack.c.l.b16 %v499
        %v948 = vunpack.c.l.b16 %v500
        %v949 = vunpack.c.l.b16 %v501
        %v950 = vunpack.c.l.b16 %v502
        %v951 = vunpack.c.l.b16 %v503
        %v952 = vunpack.c.l.b16 %v504
        %v953 = vunpack.c.l.b16 %v505
        %v954 = vunpack.c.l.b16 %v506
        %v955 = vunpack.c.l.b16 %v507
        %v956 = vunpack.c.l.b16 %v508
        %v957 = vunpack.c.l.b16 %v509
        %v958 = vunpack.c.l.b16 %v510
        %v959 = vunpack.c.l.b16 %v511
        %v960 = vunpack.c.l.b16 %v512
        %v961 = vunpack.c.l.b16 %v513
        %v962 = vunpack.c.l.b16 %v514
        %v963 = vunpack.c.l.b16 %v515
        %v964 = vunpack.c.l.b16 %v516
        %v965 = vunpack.c.l.b16 %v517
        %v966 = vunpack.c.l.b16 %v518
        %v967 = vunpack.c.l.b16 %v519
        %v968 = vunpack.c.l.b16 %v520
        %v969 = vpack.c.b16 %v906, %v905
        %v970 = vpack.c.b16 %v908, %v907
        %v971 = vpack.c.b16 %v910, %v909
        %v972 = vpack.c.b16 %v912, %v911
        %v973 = vpack.c.b16 %v914, %v913
        %v974 = vpack.c.b16 %v916, %v915
        %v975 = vpack.c.b16 %v918, %v917
        %v976 = vpack.c.b16 %v920, %v919
        %v977 = vpack.c.b16 %v922, %v921
        %v978 = vpack.c.b16 %v924, %v923
        %v979 = vpack.c.b16 %v926, %v925
        %v980 = vpack.c.b16 %v928, %v927
        %v981 = vpack.c.b16 %v930, %v929
        %v982 = vpack.c.b16 %v932, %v931
        %v983 = vpack.c.b16 %v934, %v933
        %v984 = vpack.c.b16 %v936, %v935
        %v985 = vpack.c.b16 %v938, %v937
        %v986 = vpack.c.b16 %v940, %v939
        %v987 = vpack.c.b16 %v942, %v941
        %v988 = vpack.c.b16 %v944, %v943
        %v989 = vpack.c.b16 %v946, %v945
        %v990 = vpack.c.b16 %v948, %v947
        %v991 = vpack.c.b16 %v950, %v949
        %v992 = vpack.c.b16 %v952, %v951
        %v993 = vpack.c.b16 %v954, %v953
        %v994 = vpack.c.b16 %v956, %v955
        %v995 = vpack.c.b16 %v958, %v957
        %v996 = vpack.c.b16 %v960, %v959
        %v997 = vpack.c.b16 %v962, %v961
        %v998 = vpack.c.b16 %v964, %v963
        %v999 = vpack.c.b16 %v966, %v965
        %v1000 = vpack.c.b16 %v968, %v967
        %1033 = vmatprep.subr.bf16.mxu0 0
        %1034 = vmatpush1.bf16.msra.mxu0 %v969
        %1035 = vmatprep.subr.bf16.mxu0 0
        %1036 = vmatpush1.bf16.msra.mxu0 %v970
        %1037 = vmatprep.subr.bf16.mxu0 0
        %1038 = vmatpush1.bf16.msra.mxu0 %v971
        %1039 = vmatprep.subr.bf16.mxu0 0
        %1040 = vmatpush1.bf16.msra.mxu0 %v972
        %1041 = vmatprep.subr.bf16.mxu0 0
        %1042 = vmatpush1.bf16.msra.mxu0 %v973
        %1043 = vmatprep.subr.bf16.mxu0 0
        %1044 = vmatpush1.bf16.msra.mxu0 %v974
        %1045 = vmatprep.subr.bf16.mxu0 0
        %1046 = vmatpush1.bf16.msra.mxu0 %v975
        %1047 = vmatprep.subr.bf16.mxu0 0
        %1048 = vmatpush1.bf16.msra.mxu0 %v976
        %1049 = vmatprep.subr.bf16.mxu0 0
        %1050 = vmatpush1.bf16.msra.mxu0 %v977
        %1051 = vmatprep.subr.bf16.mxu0 0
        %1052 = vmatpush1.bf16.msra.mxu0 %v978
        %1053 = vmatprep.subr.bf16.mxu0 0
        %1054 = vmatpush1.bf16.msra.mxu0 %v979
        %1055 = vmatprep.subr.bf16.mxu0 0
        %1056 = vmatpush1.bf16.msra.mxu0 %v980
        %1057 = vmatprep.subr.bf16.mxu0 0
        %1058 = vmatpush1.bf16.msra.mxu0 %v981
        %1059 = vmatprep.subr.bf16.mxu0 0
        %1060 = vmatpush1.bf16.msra.mxu0 %v982
        %1061 = vmatprep.subr.bf16.mxu0 0
        %1062 = vmatpush1.bf16.msra.mxu0 %v983
        %1063 = vmatprep.subr.bf16.mxu0 0
        %1064 = vmatpush1.bf16.msra.mxu0 %v984
        %1065 = vmatprep.mubr.bf16.mxu0 %v714
        %1066 = vmatmul.mubr.bf16.gmra.mrb[0].mxu0 %v713
        %v1067 = vpop.f32.mrb[0].mxu0
        %v1068 = vadd.f32 0.0, %v1067
        %v1069 = vpop.f32.mrb[0].mxu0
        %v1070 = vpop.f32.mrb[0].mxu0
        %v1071 = vadd.f32 0.0, %v1070
        %v1072 = vpop.f32.mrb[0].mxu0
        %1073 = vmatprep.mubr.bf16.mxu0 %v718
        %1074 = vmatmul.mubr.bf16.gmra.mrb[0].mxu0 %v717
        %v1075 = vpop.f32.mrb[0].mxu0
        %v1076 = vadd.f32 0.0, %v1075
        %v1077 = vpop.f32.mrb[0].mxu0
        %v1078 = vpop.f32.mrb[0].mxu0
        %v1079 = vadd.f32 0.0, %v1078
        %v1080 = vpop.f32.mrb[0].mxu0
        %1081 = vmatprep.mubr.bf16.mxu0 %v722
        %1082 = vmatmul.mubr.bf16.gmra.mrb[0].mxu0 %v721
        %v1083 = vpop.f32.mrb[0].mxu0
        %v1084 = vadd.f32 0.0, %v1083
        %v1085 = vpop.f32.mrb[0].mxu0
        %v1086 = vpop.f32.mrb[0].mxu0
        %v1087 = vadd.f32 0.0, %v1086
        %v1088 = vpop.f32.mrb[0].mxu0
        %1089 = vmatprep.mubr.bf16.mxu0 %v726
        %1090 = vmatmul.mubr.bf16.gmra.mrb[0].mxu0 %v725
        %v1091 = vpop.f32.mrb[0].mxu0
        %v1092 = vadd.f32 0.0, %v1091
        %v1093 = vpop.f32.mrb[0].mxu0
        %v1094 = vpop.f32.mrb[0].mxu0
        %v1095 = vadd.f32 0.0, %v1094
        %v1096 = vpop.f32.mrb[0].mxu0
        %1097 = vmatprep.mubr.bf16.mxu0 %v730
        %1098 = vmatmul.mubr.bf16.gmra.mrb[0].mxu0 %v729
        %v1099 = vpop.f32.mrb[0].mxu0
        %v1100 = vadd.f32 0.0, %v1099
        %v1101 = vpop.f32.mrb[0].mxu0
        %v1102 = vpop.f32.mrb[0].mxu0
        %v1103 = vadd.f32 0.0, %v1102
        %v1104 = vpop.f32.mrb[0].mxu0
        %1105 = vmatprep.mubr.bf16.mxu0 %v734
        %1106 = vmatmul.mubr.bf16.gmra.mrb[0].mxu0 %v733
        %v1107 = vpop.f32.mrb[0].mxu0
        %v1108 = vadd.f32 0.0, %v1107
        %v1109 = vpop.f32.mrb[0].mxu0
        %v1110 = vpop.f32.mrb[0].mxu0
        %v1111 = vadd.f32 0.0, %v1110
        %v1112 = vpop.f32.mrb[0].mxu0
        %1113 = vmatprep.mubr.bf16.mxu0 %v738
        %1114 = vmatmul.mubr.bf16.gmra.mrb[0].mxu0 %v737
        %v1115 = vpop.f32.mrb[0].mxu0
        %v1116 = vadd.f32 0.0, %v1115
        %v1117 = vpop.f32.mrb[0].mxu0
        %v1118 = vpop.f32.mrb[0].mxu0
        %v1119 = vadd.f32 0.0, %v1118
        %v1120 = vpop.f32.mrb[0].mxu0
        %1121 = vmatprep.mubr.bf16.mxu0 %v742
        %1122 = vmatmul.mubr.bf16.gmra.mrb[0].mxu0 %v741
        %v1123 = vpop.f32.mrb[0].mxu0
        %v1124 = vadd.f32 0.0, %v1123
        %v1125 = vpop.f32.mrb[0].mxu0
        %v1126 = vpop.f32.mrb[0].mxu0
        %v1127 = vadd.f32 0.0, %v1126
        %v1128 = vpop.f32.mrb[0].mxu0
        %1129 = vmatprep.mubr.bf16.mxu0 %v746
        %1130 = vmatmul.mubr.bf16.gmra.mrb[0].mxu0 %v745
        %v1131 = vpop.f32.mrb[0].mxu0
        %v1132 = vadd.f32 0.0, %v1131
        %v1133 = vpop.f32.mrb[0].mxu0
        %v1134 = vpop.f32.mrb[0].mxu0
        %v1135 = vadd.f32 0.0, %v1134
        %v1136 = vpop.f32.mrb[0].mxu0
        %1137 = vmatprep.mubr.bf16.mxu0 %v750
        %1138 = vmatmul.mubr.bf16.gmra.mrb[0].mxu0 %v749
        %v1139 = vpop.f32.mrb[0].mxu0
        %v1140 = vadd.f32 0.0, %v1139
        %v1141 = vpop.f32.mrb[0].mxu0
        %v1142 = vpop.f32.mrb[0].mxu0
        %v1143 = vadd.f32 0.0, %v1142
        %v1144 = vpop.f32.mrb[0].mxu0
        %1145 = vmatprep.mubr.bf16.mxu0 %v754
        %1146 = vmatmul.mubr.bf16.gmra.mrb[0].mxu0 %v753
        %v1147 = vpop.f32.mrb[0].mxu0
        %v1148 = vadd.f32 0.0, %v1147
        %v1149 = vpop.f32.mrb[0].mxu0
        %v1150 = vpop.f32.mrb[0].mxu0
        %v1151 = vadd.f32 0.0, %v1150
        %v1152 = vpop.f32.mrb[0].mxu0
        %1153 = vmatprep.mubr.bf16.mxu0 %v758
        %1154 = vmatmul.mubr.bf16.gmra.mrb[0].mxu0 %v757
        %v1155 = vpop.f32.mrb[0].mxu0
        %v1156 = vadd.f32 0.0, %v1155
        %v1157 = vpop.f32.mrb[0].mxu0
        %v1158 = vpop.f32.mrb[0].mxu0
        %v1159 = vadd.f32 0.0, %v1158
        %v1160 = vpop.f32.mrb[0].mxu0
        %1161 = vmatprep.mubr.bf16.mxu0 %v762
        %1162 = vmatmul.mubr.bf16.gmra.mrb[0].mxu0 %v761
        %v1163 = vpop.f32.mrb[0].mxu0
        %v1164 = vadd.f32 0.0, %v1163
        %v1165 = vpop.f32.mrb[0].mxu0
        %v1166 = vpop.f32.mrb[0].mxu0
        %v1167 = vadd.f32 0.0, %v1166
        %v1168 = vpop.f32.mrb[0].mxu0
        %1169 = vmatprep.mubr.bf16.mxu0 %v766
        %1170 = vmatmul.mubr.bf16.gmra.mrb[0].mxu0 %v765
        %v1171 = vpop.f32.mrb[0].mxu0
        %v1172 = vadd.f32 0.0, %v1171
        %v1173 = vpop.f32.mrb[0].mxu0
        %v1174 = vpop.f32.mrb[0].mxu0
        %v1175 = vadd.f32 0.0, %v1174
        %v1176 = vpop.f32.mrb[0].mxu0
        %1177 = vmatprep.mubr.bf16.mxu0 %v770
        %1178 = vmatmul.mubr.bf16.gmra.mrb[0].mxu0 %v769
        %v1179 = vpop.f32.mrb[0].mxu0
        %v1180 = vadd.f32 0.0, %v1179
        %v1181 = vpop.f32.mrb[0].mxu0
        %v1182 = vpop.f32.mrb[0].mxu0
        %v1183 = vadd.f32 0.0, %v1182
        %v1184 = vpop.f32.mrb[0].mxu0
        %1185 = vmatprep.mubr.bf16.mxu0 %v774
        %1186 = vmatmul.mubr.bf16.gmra.mrb[0].mxu0 %v773
        %v1187 = vpop.f32.mrb[0].mxu0
        %v1188 = vadd.f32 0.0, %v1187
        %v1189 = vpop.f32.mrb[0].mxu0
        %v1190 = vpop.f32.mrb[0].mxu0
        %v1191 = vadd.f32 0.0, %v1190
        %v1192 = vpop.f32.mrb[0].mxu0
        %1193 = vdwg.mxu0
        %1194 = vmatprep.subr.bf16.mxu0 0
        %1195 = vmatpush1.bf16.msra.mxu0 %v985
        %1196 = vmatprep.subr.bf16.mxu0 0
        %1197 = vmatpush1.bf16.msra.mxu0 %v986
        %1198 = vmatprep.subr.bf16.mxu0 0
        %1199 = vmatpush1.bf16.msra.mxu0 %v987
        %1200 = vmatprep.subr.bf16.mxu0 0
        %1201 = vmatpush1.bf16.msra.mxu0 %v988
        %1202 = vmatprep.subr.bf16.mxu0 0
        %1203 = vmatpush1.bf16.msra.mxu0 %v989
        %1204 = vmatprep.subr.bf16.mxu0 0
        %1205 = vmatpush1.bf16.msra.mxu0 %v990
        %1206 = vmatprep.subr.bf16.mxu0 0
        %1207 = vmatpush1.bf16.msra.mxu0 %v991
        %1208 = vmatprep.subr.bf16.mxu0 0
        %1209 = vmatpush1.bf16.msra.mxu0 %v992
        %1210 = vmatprep.subr.bf16.mxu0 0
        %1211 = vmatpush1.bf16.msra.mxu0 %v993
        %1212 = vmatprep.subr.bf16.mxu0 0
        %1213 = vmatpush1.bf16.msra.mxu0 %v994
        %1214 = vmatprep.subr.bf16.mxu0 0
        %1215 = vmatpush1.bf16.msra.mxu0 %v995
        %1216 = vmatprep.subr.bf16.mxu0 0
        %1217 = vmatpush1.bf16.msra.mxu0 %v996
        %1218 = vmatprep.subr.bf16.mxu0 0
        %1219 = vmatpush1.bf16.msra.mxu0 %v997
        %1220 = vmatprep.subr.bf16.mxu0 0
        %1221 = vmatpush1.bf16.msra.mxu0 %v998
        %1222 = vmatprep.subr.bf16.mxu0 0
        %1223 = vmatpush1.bf16.msra.mxu0 %v999
        %1224 = vmatprep.subr.bf16.mxu0 0
        %1225 = vmatpush1.bf16.msra.mxu0 %v1000
        %1226 = vmatprep.mubr.bf16.mxu0 %v716
        %1227 = vmatmul.mubr.bf16.gmra.mrb[0].mxu0 %v715
        %v1228 = vpop.f32.mrb[0].mxu0
        %v1229 = vadd.f32 %v1068, %v1228
        %v1230 = vpop.f32.mrb[0].mxu0
        %v1231 = vpop.f32.mrb[0].mxu0
        %v1232 = vadd.f32 %v1071, %v1231
        %v1233 = vpop.f32.mrb[0].mxu0
        %1234 = vmatprep.mubr.bf16.mxu0 %v720
        %1235 = vmatmul.mubr.bf16.gmra.mrb[0].mxu0 %v719
        %v1236 = vpop.f32.mrb[0].mxu0
        %v1237 = vadd.f32 %v1076, %v1236
        %v1238 = vpop.f32.mrb[0].mxu0
        %v1239 = vpop.f32.mrb[0].mxu0
        %v1240 = vadd.f32 %v1079, %v1239
        %v1241 = vpop.f32.mrb[0].mxu0
        %1242 = vmatprep.mubr.bf16.mxu0 %v724
        %1243 = vmatmul.mubr.bf16.gmra.mrb[0].mxu0 %v723
        %v1244 = vpop.f32.mrb[0].mxu0
        %v1245 = vadd.f32 %v1084, %v1244
        %v1246 = vpop.f32.mrb[0].mxu0
        %v1247 = vpop.f32.mrb[0].mxu0
        %v1248 = vadd.f32 %v1087, %v1247
        %v1249 = vpop.f32.mrb[0].mxu0
        %1250 = vmatprep.mubr.bf16.mxu0 %v728
        %1251 = vmatmul.mubr.bf16.gmra.mrb[0].mxu0 %v727
        %v1252 = vpop.f32.mrb[0].mxu0
        %v1253 = vadd.f32 %v1092, %v1252
        %v1254 = vpop.f32.mrb[0].mxu0
        %v1255 = vpop.f32.mrb[0].mxu0
        %v1256 = vadd.f32 %v1095, %v1255
        %v1257 = vpop.f32.mrb[0].mxu0
        %1258 = vmatprep.mubr.bf16.mxu0 %v732
        %1259 = vmatmul.mubr.bf16.gmra.mrb[0].mxu0 %v731
        %v1260 = vpop.f32.mrb[0].mxu0
        %v1261 = vadd.f32 %v1100, %v1260
        %v1262 = vpop.f32.mrb[0].mxu0
        %v1263 = vpop.f32.mrb[0].mxu0
        %v1264 = vadd.f32 %v1103, %v1263
        %v1265 = vpop.f32.mrb[0].mxu0
        %1266 = vmatprep.mubr.bf16.mxu0 %v736
        %1267 = vmatmul.mubr.bf16.gmra.mrb[0].mxu0 %v735
        %v1268 = vpop.f32.mrb[0].mxu0
        %v1269 = vadd.f32 %v1108, %v1268
        %v1270 = vpop.f32.mrb[0].mxu0
        %v1271 = vpop.f32.mrb[0].mxu0
        %v1272 = vadd.f32 %v1111, %v1271
        %v1273 = vpop.f32.mrb[0].mxu0
        %1274 = vmatprep.mubr.bf16.mxu0 %v740
        %1275 = vmatmul.mubr.bf16.gmra.mrb[0].mxu0 %v739
        %v1276 = vpop.f32.mrb[0].mxu0
        %v1277 = vadd.f32 %v1116, %v1276
        %v1278 = vpop.f32.mrb[0].mxu0
        %v1279 = vpop.f32.mrb[0].mxu0
        %v1280 = vadd.f32 %v1119, %v1279
        %v1281 = vpop.f32.mrb[0].mxu0
        %1282 = vmatprep.mubr.bf16.mxu0 %v744
        %1283 = vmatmul.mubr.bf16.gmra.mrb[0].mxu0 %v743
        %v1284 = vpop.f32.mrb[0].mxu0
        %v1285 = vadd.f32 %v1124, %v1284
        %v1286 = vpop.f32.mrb[0].mxu0
        %v1287 = vpop.f32.mrb[0].mxu0
        %v1288 = vadd.f32 %v1127, %v1287
        %v1289 = vpop.f32.mrb[0].mxu0
        %1290 = vmatprep.mubr.bf16.mxu0 %v748
        %1291 = vmatmul.mubr.bf16.gmra.mrb[0].mxu0 %v747
        %v1292 = vpop.f32.mrb[0].mxu0
        %v1293 = vadd.f32 %v1132, %v1292
        %v1294 = vpop.f32.mrb[0].mxu0
        %v1295 = vpop.f32.mrb[0].mxu0
        %v1296 = vadd.f32 %v1135, %v1295
        %v1297 = vpop.f32.mrb[0].mxu0
        %1298 = vmatprep.mubr.bf16.mxu0 %v752
        %1299 = vmatmul.mubr.bf16.gmra.mrb[0].mxu0 %v751
        %v1300 = vpop.f32.mrb[0].mxu0
        %v1301 = vadd.f32 %v1140, %v1300
        %v1302 = vpop.f32.mrb[0].mxu0
        %v1303 = vpop.f32.mrb[0].mxu0
        %v1304 = vadd.f32 %v1143, %v1303
        %v1305 = vpop.f32.mrb[0].mxu0
        %1306 = vmatprep.mubr.bf16.mxu0 %v756
        %1307 = vmatmul.mubr.bf16.gmra.mrb[0].mxu0 %v755
        %v1308 = vpop.f32.mrb[0].mxu0
        %v1309 = vadd.f32 %v1148, %v1308
        %v1310 = vpop.f32.mrb[0].mxu0
        %v1311 = vpop.f32.mrb[0].mxu0
        %v1312 = vadd.f32 %v1151, %v1311
        %v1313 = vpop.f32.mrb[0].mxu0
        %1314 = vmatprep.mubr.bf16.mxu0 %v760
        %1315 = vmatmul.mubr.bf16.gmra.mrb[0].mxu0 %v759
        %v1316 = vpop.f32.mrb[0].mxu0
        %v1317 = vadd.f32 %v1156, %v1316
        %v1318 = vpop.f32.mrb[0].mxu0
        %v1319 = vpop.f32.mrb[0].mxu0
        %v1320 = vadd.f32 %v1159, %v1319
        %v1321 = vpop.f32.mrb[0].mxu0
        %1322 = vmatprep.mubr.bf16.mxu0 %v764
        %1323 = vmatmul.mubr.bf16.gmra.mrb[0].mxu0 %v763
        %v1324 = vpop.f32.mrb[0].mxu0
        %v1325 = vadd.f32 %v1164, %v1324
        %v1326 = vpop.f32.mrb[0].mxu0
        %v1327 = vpop.f32.mrb[0].mxu0
        %v1328 = vadd.f32 %v1167, %v1327
        %v1329 = vpop.f32.mrb[0].mxu0
        %1330 = vmatprep.mubr.bf16.mxu0 %v768
        %1331 = vmatmul.mubr.bf16.gmra.mrb[0].mxu0 %v767
        %v1332 = vpop.f32.mrb[0].mxu0
        %v1333 = vadd.f32 %v1172, %v1332
        %v1334 = vpop.f32.mrb[0].mxu0
        %v1335 = vpop.f32.mrb[0].mxu0
        %v1336 = vadd.f32 %v1175, %v1335
        %v1337 = vpop.f32.mrb[0].mxu0
        %1338 = vmatprep.mubr.bf16.mxu0 %v772
        %1339 = vmatmul.mubr.bf16.gmra.mrb[0].mxu0 %v771
        %v1340 = vpop.f32.mrb[0].mxu0
        %v1341 = vadd.f32 %v1180, %v1340
        %v1342 = vpop.f32.mrb[0].mxu0
        %v1343 = vpop.f32.mrb[0].mxu0
        %v1344 = vadd.f32 %v1183, %v1343
        %v1345 = vpop.f32.mrb[0].mxu0
        %1346 = vmatprep.mubr.bf16.mxu0 %v776
        %1347 = vmatmul.mubr.bf16.gmra.mrb[0].mxu0 %v775
        %v1348 = vpop.f32.mrb[0].mxu0
        %v1349 = vadd.f32 %v1188, %v1348
        %v1350 = vpop.f32.mrb[0].mxu0
        %v1351 = vpop.f32.mrb[0].mxu0
        %v1352 = vadd.f32 %v1191, %v1351
        %v1353 = vpop.f32.mrb[0].mxu0
        %1354 = vdwg.mxu0
        %v1355 = vadd.f32 %v357, %v1229
        %v1356 = vadd.f32 %v358, %v1232
        %v1357 = vadd.f32 %v359, %v1237
        %v1358 = vadd.f32 %v360, %v1240
        %v1359 = vadd.f32 %v361, %v1245
        %v1360 = vadd.f32 %v362, %v1248
        %v1361 = vadd.f32 %v363, %v1253
        %v1362 = vadd.f32 %v364, %v1256
        %v1363 = vadd.f32 %v365, %v1261
        %v1364 = vadd.f32 %v366, %v1264
        %v1365 = vadd.f32 %v367, %v1269
        %v1366 = vadd.f32 %v368, %v1272
        %v1367 = vadd.f32 %v369, %v1277
        %v1368 = vadd.f32 %v370, %v1280
        %v1369 = vadd.f32 %v371, %v1285
        %v1370 = vadd.f32 %v372, %v1288
        %v1371 = vadd.f32 %v373, %v1293
        %v1372 = vadd.f32 %v374, %v1296
        %v1373 = vadd.f32 %v375, %v1301
        %v1374 = vadd.f32 %v376, %v1304
        %v1375 = vadd.f32 %v377, %v1309
        %v1376 = vadd.f32 %v378, %v1312
        %v1377 = vadd.f32 %v379, %v1317
        %v1378 = vadd.f32 %v380, %v1320
        %v1379 = vadd.f32 %v381, %v1325
        %v1380 = vadd.f32 %v382, %v1328
        %v1381 = vadd.f32 %v383, %v1333
        %v1382 = vadd.f32 %v384, %v1336
        %v1383 = vadd.f32 %v385, %v1341
        %v1384 = vadd.f32 %v386, %v1344
        %v1385 = vadd.f32 %v387, %v1349
        %v1386 = vadd.f32 %v388, %v1352
        %1387 = vst [vmem:[#allocation2] sm:$0xff] %v1355
        %1388 = vst [vmem:[#allocation2 + $0x8] sm:$0xff] %v1356
        %1389 = vst [vmem:[#allocation2 + $0x10] sm:$0xff] %v1357
        %1390 = vst [vmem:[#allocation2 + $0x18] sm:$0xff] %v1358
        %1391 = vst [vmem:[#allocation2 + $0x20] sm:$0xff] %v1359
        %1392 = vst [vmem:[#allocation2 + $0x28] sm:$0xff] %v1360
        %1393 = vst [vmem:[#allocation2 + $0x30] sm:$0xff] %v1361
        %1394 = vst [vmem:[#allocation2 + $0x38] sm:$0xff] %v1362
        %1395 = vst [vmem:[#allocation2 + $0x40] sm:$0xff] %v1363
        %1396 = vst [vmem:[#allocation2 + $0x48] sm:$0xff] %v1364
        %1397 = vst [vmem:[#allocation2 + $0x50] sm:$0xff] %v1365
        %1398 = vst [vmem:[#allocation2 + $0x58] sm:$0xff] %v1366
        %1399 = vst [vmem:[#allocation2 + $0x60] sm:$0xff] %v1367
        %1400 = vst [vmem:[#allocation2 + $0x68] sm:$0xff] %v1368
        %1401 = vst [vmem:[#allocation2 + $0x70] sm:$0xff] %v1369
        %1402 = vst [vmem:[#allocation2 + $0x78] sm:$0xff] %v1370
        %1403 = vst [vmem:[#allocation2 + $0x80] sm:$0xff] %v1371
        %1404 = vst [vmem:[#allocation2 + $0x88] sm:$0xff] %v1372
        %1405 = vst [vmem:[#allocation2 + $0x90] sm:$0xff] %v1373
        %1406 = vst [vmem:[#allocation2 + $0x98] sm:$0xff] %v1374
        %1407 = vst [vmem:[#allocation2 + $0xa0] sm:$0xff] %v1375
        %1408 = vst [vmem:[#allocation2 + $0xa8] sm:$0xff] %v1376
        %1409 = vst [vmem:[#allocation2 + $0xb0] sm:$0xff] %v1377
        %1410 = vst [vmem:[#allocation2 + $0xb8] sm:$0xff] %v1378
        %1411 = vst [vmem:[#allocation2 + $0xc0] sm:$0xff] %v1379
        %1412 = vst [vmem:[#allocation2 + $0xc8] sm:$0xff] %v1380
        %1413 = vst [vmem:[#allocation2 + $0xd0] sm:$0xff] %v1381
        %1414 = vst [vmem:[#allocation2 + $0xd8] sm:$0xff] %v1382
        %1415 = vst [vmem:[#allocation2 + $0xe0] sm:$0xff] %v1383
        %1416 = vst [vmem:[#allocation2 + $0xe8] sm:$0xff] %v1384
        %1417 = vst [vmem:[#allocation2 + $0xf0] sm:$0xff] %v1385
        %1418 = vst [vmem:[#allocation2 + $0xf8] sm:$0xff] %v1386
        %p1419 = scmp.eq.s32.totalorder %s29, 1
        // Predicated region
        $region65: #{tpu_custom_call.1} parent=39 // pred_check
          %p1420 = pneg %p1419
        $region66: #{tpu_custom_call.1} parent=39 // pred_check_branch
          %1422 = sbr.rel (%p1420) target = $region68
        $region67: #{tpu_custom_call.1} parent=39 // pred_region
          %v1423 = vld [vmem:[#allocation2] sm:$0xff]
          %v1424 = vld [vmem:[#allocation2 + $0x8] sm:$0xff]
          %v1425 = vld [vmem:[#allocation2 + $0x10] sm:$0xff]
          %v1426 = vld [vmem:[#allocation2 + $0x18] sm:$0xff]
          %v1427 = vld [vmem:[#allocation2 + $0x20] sm:$0xff]
          %v1428 = vld [vmem:[#allocation2 + $0x28] sm:$0xff]
          %v1429 = vld [vmem:[#allocation2 + $0x30] sm:$0xff]
          %v1430 = vld [vmem:[#allocation2 + $0x38] sm:$0xff]
          %v1431 = vld [vmem:[#allocation2 + $0x40] sm:$0xff]
          %v1432 = vld [vmem:[#allocation2 + $0x48] sm:$0xff]
          %v1433 = vld [vmem:[#allocation2 + $0x50] sm:$0xff]
          %v1434 = vld [vmem:[#allocation2 + $0x58] sm:$0xff]
          %v1435 = vld [vmem:[#allocation2 + $0x60] sm:$0xff]
          %v1436 = vld [vmem:[#allocation2 + $0x68] sm:$0xff]
          %v1437 = vld [vmem:[#allocation2 + $0x70] sm:$0xff]
          %v1438 = vld [vmem:[#allocation2 + $0x78] sm:$0xff]
          %v1439 = vld [vmem:[#allocation2 + $0x80] sm:$0xff]
          %v1440 = vld [vmem:[#allocation2 + $0x88] sm:$0xff]
          %v1441 = vld [vmem:[#allocation2 + $0x90] sm:$0xff]
          %v1442 = vld [vmem:[#allocation2 + $0x98] sm:$0xff]
          %v1443 = vld [vmem:[#allocation2 + $0xa0] sm:$0xff]
          %v1444 = vld [vmem:[#allocation2 + $0xa8] sm:$0xff]
          %v1445 = vld [vmem:[#allocation2 + $0xb0] sm:$0xff]
          %v1446 = vld [vmem:[#allocation2 + $0xb8] sm:$0xff]
          %v1447 = vld [vmem:[#allocation2 + $0xc0] sm:$0xff]
          %v1448 = vld [vmem:[#allocation2 + $0xc8] sm:$0xff]
          %v1449 = vld [vmem:[#allocation2 + $0xd0] sm:$0xff]
          %v1450 = vld [vmem:[#allocation2 + $0xd8] sm:$0xff]
          %v1451 = vld [vmem:[#allocation2 + $0xe0] sm:$0xff]
          %v1452 = vld [vmem:[#allocation2 + $0xe8] sm:$0xff]
          %v1453 = vld [vmem:[#allocation2 + $0xf0] sm:$0xff]
          %v1454 = vld [vmem:[#allocation2 + $0xf8] sm:$0xff]
          %v1455 = vpack.c.bf16 %v1424, %v1423
          %v1456 = vpack.c.bf16 %v1426, %v1425
          %v1457 = vpack.c.bf16 %v1428, %v1427
          %v1458 = vpack.c.bf16 %v1430, %v1429
          %v1459 = vpack.c.bf16 %v1432, %v1431
          %v1460 = vpack.c.bf16 %v1434, %v1433
          %v1461 = vpack.c.bf16 %v1436, %v1435
          %v1462 = vpack.c.bf16 %v1438, %v1437
          %v1463 = vpack.c.bf16 %v1440, %v1439
          %v1464 = vpack.c.bf16 %v1442, %v1441
          %v1465 = vpack.c.bf16 %v1444, %v1443
          %v1466 = vpack.c.bf16 %v1446, %v1445
          %v1467 = vpack.c.bf16 %v1448, %v1447
          %v1468 = vpack.c.bf16 %v1450, %v1449
          %v1469 = vpack.c.bf16 %v1452, %v1451
          %v1470 = vpack.c.bf16 %v1454, %v1453
          %v1471 = vld [vmem:[#allocation8] sm:$0xf]
          %v1472 = vld [vmem:[#allocation8 + $0x4] sm:$0xf]
          %v1473 = vld [vmem:[#allocation8 + $0x8] sm:$0xf]
          %v1474 = vld [vmem:[#allocation8 + $0xc] sm:$0xf]
          %v1475 = vld [vmem:[#allocation8 + $0x10] sm:$0xf]
          %v1476 = vld [vmem:[#allocation8 + $0x14] sm:$0xf]
          %v1477 = vld [vmem:[#allocation8 + $0x18] sm:$0xf]
          %v1478 = vld [vmem:[#allocation8 + $0x1c] sm:$0xf]
          %v1479 = vld [vmem:[#allocation8 + $0x20] sm:$0xf]
          %v1480 = vld [vmem:[#allocation8 + $0x24] sm:$0xf]
          %v1481 = vld [vmem:[#allocation8 + $0x28] sm:$0xf]
          %v1482 = vld [vmem:[#allocation8 + $0x2c] sm:$0xf]
          %v1483 = vld [vmem:[#allocation8 + $0x30] sm:$0xf]
          %v1484 = vld [vmem:[#allocation8 + $0x34] sm:$0xf]
          %v1485 = vld [vmem:[#allocation8 + $0x38] sm:$0xf]
          %v1486 = vld [vmem:[#allocation8 + $0x3c] sm:$0xf]
          %v1487 = vld [vmem:[#allocation9] sm:$0x1]
          %v1489 = vlaneseq
          %v1490 = vshrl.u32 %v1489, 7
          %v1491 = vsub.s32 0, %v1490
          %v1492 = vrot.slane %v1487, %v1491
          %v1510 = vunpack.c.l.b16 %v1471
          %v1511 = vunpack.c.l.b16 %v1472
          %v1512 = vunpack.c.l.b16 %v1473
          %v1513 = vunpack.c.l.b16 %v1474
          %v1514 = vunpack.c.l.b16 %v1475
          %v1515 = vunpack.c.l.b16 %v1476
          %v1516 = vunpack.c.l.b16 %v1477
          %v1517 = vunpack.c.l.b16 %v1478
          %v1518 = vunpack.c.l.b16 %v1479
          %v1519 = vunpack.c.l.b16 %v1480
          %v1520 = vunpack.c.l.b16 %v1481
          %v1521 = vunpack.c.l.b16 %v1482
          %v1522 = vunpack.c.l.b16 %v1483
          %v1523 = vunpack.c.l.b16 %v1484
          %v1524 = vunpack.c.l.b16 %v1485
          %v1525 = vunpack.c.l.b16 %v1486
          %v1526 = vpack.c.b16 %v1511, %v1510
          %v1527 = vpack.c.b16 %v1513, %v1512
          %v1528 = vpack.c.b16 %v1515, %v1514
          %v1529 = vpack.c.b16 %v1517, %v1516
          %v1530 = vpack.c.b16 %v1519, %v1518
          %v1531 = vpack.c.b16 %v1521, %v1520
          %v1532 = vpack.c.b16 %v1523, %v1522
          %v1533 = vpack.c.b16 %v1525, %v1524
          %1542 = vmatprep.subr.bf16.mxu0 0
          %1543 = vmatpush1.bf16.msra.mxu0 %v1526
          %1544 = vmatprep.subr.bf16.mxu0 0
          %1545 = vmatpush1.bf16.msra.mxu0 %v1527
          %1546 = vmatprep.subr.bf16.mxu0 0
          %1547 = vmatpush1.bf16.msra.mxu0 %v1528
          %1548 = vmatprep.subr.bf16.mxu0 0
          %1549 = vmatpush1.bf16.msra.mxu0 %v1529
          %1550 = vmatprep.subr.bf16.mxu0 0
          %1551 = vmatpush1.bf16.msra.mxu0 %v1530
          %1552 = vmatprep.subr.bf16.mxu0 0
          %1553 = vmatpush1.bf16.msra.mxu0 %v1531
          %1554 = vmatprep.subr.bf16.mxu0 0
          %1555 = vmatpush1.bf16.msra.mxu0 %v1532
          %1556 = vmatprep.subr.bf16.mxu0 0
          %1557 = vmatpush1.bf16.msra.mxu0 %v1533
          %1558 = vmatprep.subr.bf16.mxu0 0
          %1559 = vmatpush1.bf16.msra.mxu0 0
          %1560 = vmatprep.subr.bf16.mxu0 0
          %1561 = vmatpush1.bf16.msra.mxu0 0
          %1562 = vmatprep.subr.bf16.mxu0 0
          %1563 = vmatpush1.bf16.msra.mxu0 0
          %1564 = vmatprep.subr.bf16.mxu0 0
          %1565 = vmatpush1.bf16.msra.mxu0 0
          %1566 = vmatprep.subr.bf16.mxu0 0
          %1567 = vmatpush1.bf16.msra.mxu0 0
          %1568 = vmatprep.subr.bf16.mxu0 0
          %1569 = vmatpush1.bf16.msra.mxu0 0
          %1570 = vmatprep.subr.bf16.mxu0 0
          %1571 = vmatpush1.bf16.msra.mxu0 0
          %1572 = vmatprep.subr.bf16.mxu0 0
          %1573 = vmatpush1.bf16.msra.mxu0 0
          %1574 = vmatprep.mubr.bf16.mxu0 0
          %1575 = vmatmul.mubr.bf16.gmra.mrb[0].mxu0 %v1455
          %v1576 = vpop.f32.mrb[0].mxu0
          %v1577 = vadd.f32 %v1492, %v1576
          %v1578 = vpop.f32.mrb[0].mxu0
          %v1579 = vpop.f32.mrb[0].mxu0
          %v1580 = vadd.f32 %v1492, %v1579
          %v1581 = vpop.f32.mrb[0].mxu0
          %1582 = vmatprep.mubr.bf16.mxu0 0
          %1583 = vmatmul.mubr.bf16.gmra.mrb[0].mxu0 %v1456
          %v1584 = vpop.f32.mrb[0].mxu0
          %v1585 = vadd.f32 %v1492, %v1584
          %v1586 = vpop.f32.mrb[0].mxu0
          %v1587 = vpop.f32.mrb[0].mxu0
          %v1588 = vadd.f32 %v1492, %v1587
          %v1589 = vpop.f32.mrb[0].mxu0
          %1590 = vmatprep.mubr.bf16.mxu0 0
          %1591 = vmatmul.mubr.bf16.gmra.mrb[0].mxu0 %v1457
          %v1592 = vpop.f32.mrb[0].mxu0
          %v1593 = vadd.f32 %v1492, %v1592
          %v1594 = vpop.f32.mrb[0].mxu0
          %v1595 = vpop.f32.mrb[0].mxu0
          %v1596 = vadd.f32 %v1492, %v1595
          %v1597 = vpop.f32.mrb[0].mxu0
          %1598 = vmatprep.mubr.bf16.mxu0 0
          %1599 = vmatmul.mubr.bf16.gmra.mrb[0].mxu0 %v1458
          %v1600 = vpop.f32.mrb[0].mxu0
          %v1601 = vadd.f32 %v1492, %v1600
          %v1602 = vpop.f32.mrb[0].mxu0
          %v1603 = vpop.f32.mrb[0].mxu0
          %v1604 = vadd.f32 %v1492, %v1603
          %v1605 = vpop.f32.mrb[0].mxu0
          %1606 = vmatprep.mubr.bf16.mxu0 0
          %1607 = vmatmul.mubr.bf16.gmra.mrb[0].mxu0 %v1459
          %v1608 = vpop.f32.mrb[0].mxu0
          %v1609 = vadd.f32 %v1492, %v1608
          %v1610 = vpop.f32.mrb[0].mxu0
          %v1611 = vpop.f32.mrb[0].mxu0
          %v1612 = vadd.f32 %v1492, %v1611
          %v1613 = vpop.f32.mrb[0].mxu0
          %1614 = vmatprep.mubr.bf16.mxu0 0
          %1615 = vmatmul.mubr.bf16.gmra.mrb[0].mxu0 %v1460
          %v1616 = vpop.f32.mrb[0].mxu0
          %v1617 = vadd.f32 %v1492, %v1616
          %v1618 = vpop.f32.mrb[0].mxu0
          %v1619 = vpop.f32.mrb[0].mxu0
          %v1620 = vadd.f32 %v1492, %v1619
          %v1621 = vpop.f32.mrb[0].mxu0
          %1622 = vmatprep.mubr.bf16.mxu0 0
          %1623 = vmatmul.mubr.bf16.gmra.mrb[0].mxu0 %v1461
          %v1624 = vpop.f32.mrb[0].mxu0
          %v1625 = vadd.f32 %v1492, %v1624
          %v1626 = vpop.f32.mrb[0].mxu0
          %v1627 = vpop.f32.mrb[0].mxu0
          %v1628 = vadd.f32 %v1492, %v1627
          %v1629 = vpop.f32.mrb[0].mxu0
          %1630 = vmatprep.mubr.bf16.mxu0 0
          %1631 = vmatmul.mubr.bf16.gmra.mrb[0].mxu0 %v1462
          %v1632 = vpop.f32.mrb[0].mxu0
          %v1633 = vadd.f32 %v1492, %v1632
          %v1634 = vpop.f32.mrb[0].mxu0
          %v1635 = vpop.f32.mrb[0].mxu0
          %v1636 = vadd.f32 %v1492, %v1635
          %v1637 = vpop.f32.mrb[0].mxu0
          %1638 = vmatprep.mubr.bf16.mxu0 0
          %1639 = vmatmul.mubr.bf16.gmra.mrb[0].mxu0 %v1463
          %v1640 = vpop.f32.mrb[0].mxu0
          %v1641 = vadd.f32 %v1492, %v1640
          %v1642 = vpop.f32.mrb[0].mxu0
          %v1643 = vpop.f32.mrb[0].mxu0
          %v1644 = vadd.f32 %v1492, %v1643
          %v1645 = vpop.f32.mrb[0].mxu0
          %1646 = vmatprep.mubr.bf16.mxu0 0
          %1647 = vmatmul.mubr.bf16.gmra.mrb[0].mxu0 %v1464
          %v1648 = vpop.f32.mrb[0].mxu0
          %v1649 = vadd.f32 %v1492, %v1648
          %v1650 = vpop.f32.mrb[0].mxu0
          %v1651 = vpop.f32.mrb[0].mxu0
          %v1652 = vadd.f32 %v1492, %v1651
          %v1653 = vpop.f32.mrb[0].mxu0
          %1654 = vmatprep.mubr.bf16.mxu0 0
          %1655 = vmatmul.mubr.bf16.gmra.mrb[0].mxu0 %v1465
          %v1656 = vpop.f32.mrb[0].mxu0
          %v1657 = vadd.f32 %v1492, %v1656
          %v1658 = vpop.f32.mrb[0].mxu0
          %v1659 = vpop.f32.mrb[0].mxu0
          %v1660 = vadd.f32 %v1492, %v1659
          %v1661 = vpop.f32.mrb[0].mxu0
          %1662 = vmatprep.mubr.bf16.mxu0 0
          %1663 = vmatmul.mubr.bf16.gmra.mrb[0].mxu0 %v1466
          %v1664 = vpop.f32.mrb[0].mxu0
          %v1665 = vadd.f32 %v1492, %v1664
          %v1666 = vpop.f32.mrb[0].mxu0
          %v1667 = vpop.f32.mrb[0].mxu0
          %v1668 = vadd.f32 %v1492, %v1667
          %v1669 = vpop.f32.mrb[0].mxu0
          %1670 = vmatprep.mubr.bf16.mxu0 0
          %1671 = vmatmul.mubr.bf16.gmra.mrb[0].mxu0 %v1467
          %v1672 = vpop.f32.mrb[0].mxu0
          %v1673 = vadd.f32 %v1492, %v1672
          %v1674 = vpop.f32.mrb[0].mxu0
          %v1675 = vpop.f32.mrb[0].mxu0
          %v1676 = vadd.f32 %v1492, %v1675
          %v1677 = vpop.f32.mrb[0].mxu0
          %1678 = vmatprep.mubr.bf16.mxu0 0
          %1679 = vmatmul.mubr.bf16.gmra.mrb[0].mxu0 %v1468
          %v1680 = vpop.f32.mrb[0].mxu0
          %v1681 = vadd.f32 %v1492, %v1680
          %v1682 = vpop.f32.mrb[0].mxu0
          %v1683 = vpop.f32.mrb[0].mxu0
          %v1684 = vadd.f32 %v1492, %v1683
          %v1685 = vpop.f32.mrb[0].mxu0
          %1686 = vmatprep.mubr.bf16.mxu0 0
          %1687 = vmatmul.mubr.bf16.gmra.mrb[0].mxu0 %v1469
          %v1688 = vpop.f32.mrb[0].mxu0
          %v1689 = vadd.f32 %v1492, %v1688
          %v1690 = vpop.f32.mrb[0].mxu0
          %v1691 = vpop.f32.mrb[0].mxu0
          %v1692 = vadd.f32 %v1492, %v1691
          %v1693 = vpop.f32.mrb[0].mxu0
          %1694 = vmatprep.mubr.bf16.mxu0 0
          %1695 = vmatmul.mubr.bf16.gmra.mrb[0].mxu0 %v1470
          %v1696 = vpop.f32.mrb[0].mxu0
          %v1697 = vadd.f32 %v1492, %v1696
          %v1698 = vpop.f32.mrb[0].mxu0
          %v1699 = vpop.f32.mrb[0].mxu0
          %v1700 = vadd.f32 %v1492, %v1699
          %v1701 = vpop.f32.mrb[0].mxu0
          %1702 = vdwg.mxu0
          %v1703 = vmax.f32 %v1577, 0.0
          %v1704 = vmax.f32 %v1580, 0.0
          %v1705 = vmax.f32 %v1585, 0.0
          %v1706 = vmax.f32 %v1588, 0.0
          %v1707 = vmax.f32 %v1593, 0.0
          %v1708 = vmax.f32 %v1596, 0.0
          %v1709 = vmax.f32 %v1601, 0.0
          %v1710 = vmax.f32 %v1604, 0.0
          %v1711 = vmax.f32 %v1609, 0.0
          %v1712 = vmax.f32 %v1612, 0.0
          %v1713 = vmax.f32 %v1617, 0.0
          %v1714 = vmax.f32 %v1620, 0.0
          %v1715 = vmax.f32 %v1625, 0.0
          %v1716 = vmax.f32 %v1628, 0.0
          %v1717 = vmax.f32 %v1633, 0.0
          %v1718 = vmax.f32 %v1636, 0.0
          %v1719 = vmax.f32 %v1641, 0.0
          %v1720 = vmax.f32 %v1644, 0.0
          %v1721 = vmax.f32 %v1649, 0.0
          %v1722 = vmax.f32 %v1652, 0.0
          %v1723 = vmax.f32 %v1657, 0.0
          %v1724 = vmax.f32 %v1660, 0.0
          %v1725 = vmax.f32 %v1665, 0.0
          %v1726 = vmax.f32 %v1668, 0.0
          %v1727 = vmax.f32 %v1673, 0.0
          %v1728 = vmax.f32 %v1676, 0.0
          %v1729 = vmax.f32 %v1681, 0.0
          %v1730 = vmax.f32 %v1684, 0.0
          %v1731 = vmax.f32 %v1689, 0.0
          %v1732 = vmax.f32 %v1692, 0.0
          %v1733 = vmax.f32 %v1697, 0.0
          %v1734 = vmax.f32 %v1700, 0.0
          %v1735 = vpack.c.bf16 %v1704, %v1703
          %v1736 = vpack.c.bf16 %v1706, %v1705
          %v1737 = vpack.c.bf16 %v1708, %v1707
          %v1738 = vpack.c.bf16 %v1710, %v1709
          %v1739 = vpack.c.bf16 %v1712, %v1711
          %v1740 = vpack.c.bf16 %v1714, %v1713
          %v1741 = vpack.c.bf16 %v1716, %v1715
          %v1742 = vpack.c.bf16 %v1718, %v1717
          %v1743 = vpack.c.bf16 %v1720, %v1719
          %v1744 = vpack.c.bf16 %v1722, %v1721
          %v1745 = vpack.c.bf16 %v1724, %v1723
          %v1746 = vpack.c.bf16 %v1726, %v1725
          %v1747 = vpack.c.bf16 %v1728, %v1727
          %v1748 = vpack.c.bf16 %v1730, %v1729
          %v1749 = vpack.c.bf16 %v1732, %v1731
          %v1750 = vpack.c.bf16 %v1734, %v1733
          %v1751 = vld [vmem:[#allocation11] sm:$0xf]
          %v1752 = vld [vmem:[#allocation11 + $0x4] sm:$0xf]
          %v1753 = vld [vmem:[#allocation11 + $0x8] sm:$0xf]
          %v1754 = vld [vmem:[#allocation11 + $0xc] sm:$0xf]
          %v1755 = vld [vmem:[#allocation11 + $0x10] sm:$0xf]
          %v1756 = vld [vmem:[#allocation11 + $0x14] sm:$0xf]
          %v1757 = vld [vmem:[#allocation11 + $0x18] sm:$0xf]
          %v1758 = vld [vmem:[#allocation11 + $0x1c] sm:$0xf]
          %v1759 = vld [vmem:[#allocation11 + $0x20] sm:$0xf]
          %v1760 = vld [vmem:[#allocation11 + $0x24] sm:$0xf]
          %v1761 = vld [vmem:[#allocation11 + $0x28] sm:$0xf]
          %v1762 = vld [vmem:[#allocation11 + $0x2c] sm:$0xf]
          %v1763 = vld [vmem:[#allocation11 + $0x30] sm:$0xf]
          %v1764 = vld [vmem:[#allocation11 + $0x34] sm:$0xf]
          %v1765 = vld [vmem:[#allocation11 + $0x38] sm:$0xf]
          %v1766 = vld [vmem:[#allocation11 + $0x3c] sm:$0xf]
          %v1783 = vunpack.c.l.b16 %v1751
          %v1784 = vunpack.c.l.b16 %v1752
          %v1785 = vunpack.c.l.b16 %v1753
          %v1786 = vunpack.c.l.b16 %v1754
          %v1787 = vunpack.c.l.b16 %v1755
          %v1788 = vunpack.c.l.b16 %v1756
          %v1789 = vunpack.c.l.b16 %v1757
          %v1790 = vunpack.c.l.b16 %v1758
          %v1791 = vunpack.c.l.b16 %v1759
          %v1792 = vunpack.c.l.b16 %v1760
          %v1793 = vunpack.c.l.b16 %v1761
          %v1794 = vunpack.c.l.b16 %v1762
          %v1795 = vunpack.c.l.b16 %v1763
          %v1796 = vunpack.c.l.b16 %v1764
          %v1797 = vunpack.c.l.b16 %v1765
          %v1798 = vunpack.c.l.b16 %v1766
          %v1799 = vpack.c.b16 %v1784, %v1783
          %v1800 = vpack.c.b16 %v1786, %v1785
          %v1801 = vpack.c.b16 %v1788, %v1787
          %v1802 = vpack.c.b16 %v1790, %v1789
          %v1803 = vpack.c.b16 %v1792, %v1791
          %v1804 = vpack.c.b16 %v1794, %v1793
          %v1805 = vpack.c.b16 %v1796, %v1795
          %v1806 = vpack.c.b16 %v1798, %v1797
          %1815 = vmatprep.subr.bf16.mxu0 0
          %1816 = vmatpush1.bf16.msra.mxu0 %v1799
          %1817 = vmatprep.subr.bf16.mxu0 0
          %1818 = vmatpush1.bf16.msra.mxu0 %v1800
          %1819 = vmatprep.subr.bf16.mxu0 0
          %1820 = vmatpush1.bf16.msra.mxu0 %v1801
          %1821 = vmatprep.subr.bf16.mxu0 0
          %1822 = vmatpush1.bf16.msra.mxu0 %v1802
          %1823 = vmatprep.subr.bf16.mxu0 0
          %1824 = vmatpush1.bf16.msra.mxu0 %v1803
          %1825 = vmatprep.subr.bf16.mxu0 0
          %1826 = vmatpush1.bf16.msra.mxu0 %v1804
          %1827 = vmatprep.subr.bf16.mxu0 0
          %1828 = vmatpush1.bf16.msra.mxu0 %v1805
          %1829 = vmatprep.subr.bf16.mxu0 0
          %1830 = vmatpush1.bf16.msra.mxu0 %v1806
          %1831 = vmatprep.subr.bf16.mxu0 0
          %1832 = vmatpush1.bf16.msra.mxu0 0
          %1833 = vmatprep.subr.bf16.mxu0 0
          %1834 = vmatpush1.bf16.msra.mxu0 0
          %1835 = vmatprep.subr.bf16.mxu0 0
          %1836 = vmatpush1.bf16.msra.mxu0 0
          %1837 = vmatprep.subr.bf16.mxu0 0
          %1838 = vmatpush1.bf16.msra.mxu0 0
          %1839 = vmatprep.subr.bf16.mxu0 0
          %1840 = vmatpush1.bf16.msra.mxu0 0
          %1841 = vmatprep.subr.bf16.mxu0 0
          %1842 = vmatpush1.bf16.msra.mxu0 0
          %1843 = vmatprep.subr.bf16.mxu0 0
          %1844 = vmatpush1.bf16.msra.mxu0 0
          %1845 = vmatprep.subr.bf16.mxu0 0
          %1846 = vmatpush1.bf16.msra.mxu0 0
          %1847 = vmatprep.mubr.bf16.mxu0 0
          %1848 = vmatmul.mubr.bf16.gmra.mrb[0].mxu0 %v1735
          %v1849 = vpop.f32.mrb[0].mxu0
          %v1850 = vadd.f32 0.0, %v1849
          %v1851 = vpop.f32.mrb[0].mxu0
          %v1852 = vpop.f32.mrb[0].mxu0
          %v1853 = vadd.f32 0.0, %v1852
          %v1854 = vpop.f32.mrb[0].mxu0
          %1855 = vmatprep.mubr.bf16.mxu0 0
          %1856 = vmatmul.mubr.bf16.gmra.mrb[0].mxu0 %v1736
          %v1857 = vpop.f32.mrb[0].mxu0
          %v1858 = vadd.f32 0.0, %v1857
          %v1859 = vpop.f32.mrb[0].mxu0
          %v1860 = vpop.f32.mrb[0].mxu0
          %v1861 = vadd.f32 0.0, %v1860
          %v1862 = vpop.f32.mrb[0].mxu0
          %1863 = vmatprep.mubr.bf16.mxu0 0
          %1864 = vmatmul.mubr.bf16.gmra.mrb[0].mxu0 %v1737
          %v1865 = vpop.f32.mrb[0].mxu0
          %v1866 = vadd.f32 0.0, %v1865
          %v1867 = vpop.f32.mrb[0].mxu0
          %v1868 = vpop.f32.mrb[0].mxu0
          %v1869 = vadd.f32 0.0, %v1868
          %v1870 = vpop.f32.mrb[0].mxu0
          %1871 = vmatprep.mubr.bf16.mxu0 0
          %1872 = vmatmul.mubr.bf16.gmra.mrb[0].mxu0 %v1738
          %v1873 = vpop.f32.mrb[0].mxu0
          %v1874 = vadd.f32 0.0, %v1873
          %v1875 = vpop.f32.mrb[0].mxu0
          %v1876 = vpop.f32.mrb[0].mxu0
          %v1877 = vadd.f32 0.0, %v1876
          %v1878 = vpop.f32.mrb[0].mxu0
          %1879 = vmatprep.mubr.bf16.mxu0 0
          %1880 = vmatmul.mubr.bf16.gmra.mrb[0].mxu0 %v1739
          %v1881 = vpop.f32.mrb[0].mxu0
          %v1882 = vadd.f32 0.0, %v1881
          %v1883 = vpop.f32.mrb[0].mxu0
          %v1884 = vpop.f32.mrb[0].mxu0
          %v1885 = vadd.f32 0.0, %v1884
          %v1886 = vpop.f32.mrb[0].mxu0
          %1887 = vmatprep.mubr.bf16.mxu0 0
          %1888 = vmatmul.mubr.bf16.gmra.mrb[0].mxu0 %v1740
          %v1889 = vpop.f32.mrb[0].mxu0
          %v1890 = vadd.f32 0.0, %v1889
          %v1891 = vpop.f32.mrb[0].mxu0
          %v1892 = vpop.f32.mrb[0].mxu0
          %v1893 = vadd.f32 0.0, %v1892
          %v1894 = vpop.f32.mrb[0].mxu0
          %1895 = vmatprep.mubr.bf16.mxu0 0
          %1896 = vmatmul.mubr.bf16.gmra.mrb[0].mxu0 %v1741
          %v1897 = vpop.f32.mrb[0].mxu0
          %v1898 = vadd.f32 0.0, %v1897
          %v1899 = vpop.f32.mrb[0].mxu0
          %v1900 = vpop.f32.mrb[0].mxu0
          %v1901 = vadd.f32 0.0, %v1900
          %v1902 = vpop.f32.mrb[0].mxu0
          %1903 = vmatprep.mubr.bf16.mxu0 0
          %1904 = vmatmul.mubr.bf16.gmra.mrb[0].mxu0 %v1742
          %v1905 = vpop.f32.mrb[0].mxu0
          %v1906 = vadd.f32 0.0, %v1905
          %v1907 = vpop.f32.mrb[0].mxu0
          %v1908 = vpop.f32.mrb[0].mxu0
          %v1909 = vadd.f32 0.0, %v1908
          %v1910 = vpop.f32.mrb[0].mxu0
          %1911 = vmatprep.mubr.bf16.mxu0 0
          %1912 = vmatmul.mubr.bf16.gmra.mrb[0].mxu0 %v1743
          %v1913 = vpop.f32.mrb[0].mxu0
          %v1914 = vadd.f32 0.0, %v1913
          %v1915 = vpop.f32.mrb[0].mxu0
          %v1916 = vpop.f32.mrb[0].mxu0
          %v1917 = vadd.f32 0.0, %v1916
          %v1918 = vpop.f32.mrb[0].mxu0
          %1919 = vmatprep.mubr.bf16.mxu0 0
          %1920 = vmatmul.mubr.bf16.gmra.mrb[0].mxu0 %v1744
          %v1921 = vpop.f32.mrb[0].mxu0
          %v1922 = vadd.f32 0.0, %v1921
          %v1923 = vpop.f32.mrb[0].mxu0
          %v1924 = vpop.f32.mrb[0].mxu0
          %v1925 = vadd.f32 0.0, %v1924
          %v1926 = vpop.f32.mrb[0].mxu0
          %1927 = vmatprep.mubr.bf16.mxu0 0
          %1928 = vmatmul.mubr.bf16.gmra.mrb[0].mxu0 %v1745
          %v1929 = vpop.f32.mrb[0].mxu0
          %v1930 = vadd.f32 0.0, %v1929
          %v1931 = vpop.f32.mrb[0].mxu0
          %v1932 = vpop.f32.mrb[0].mxu0
          %v1933 = vadd.f32 0.0, %v1932
          %v1934 = vpop.f32.mrb[0].mxu0
          %1935 = vmatprep.mubr.bf16.mxu0 0
          %1936 = vmatmul.mubr.bf16.gmra.mrb[0].mxu0 %v1746
          %v1937 = vpop.f32.mrb[0].mxu0
          %v1938 = vadd.f32 0.0, %v1937
          %v1939 = vpop.f32.mrb[0].mxu0
          %v1940 = vpop.f32.mrb[0].mxu0
          %v1941 = vadd.f32 0.0, %v1940
          %v1942 = vpop.f32.mrb[0].mxu0
          %1943 = vmatprep.mubr.bf16.mxu0 0
          %1944 = vmatmul.mubr.bf16.gmra.mrb[0].mxu0 %v1747
          %v1945 = vpop.f32.mrb[0].mxu0
          %v1946 = vadd.f32 0.0, %v1945
          %v1947 = vpop.f32.mrb[0].mxu0
          %v1948 = vpop.f32.mrb[0].mxu0
          %v1949 = vadd.f32 0.0, %v1948
          %v1950 = vpop.f32.mrb[0].mxu0
          %1951 = vmatprep.mubr.bf16.mxu0 0
          %1952 = vmatmul.mubr.bf16.gmra.mrb[0].mxu0 %v1748
          %v1953 = vpop.f32.mrb[0].mxu0
          %v1954 = vadd.f32 0.0, %v1953
          %v1955 = vpop.f32.mrb[0].mxu0
          %v1956 = vpop.f32.mrb[0].mxu0
          %v1957 = vadd.f32 0.0, %v1956
          %v1958 = vpop.f32.mrb[0].mxu0
          %1959 = vmatprep.mubr.bf16.mxu0 0
          %1960 = vmatmul.mubr.bf16.gmra.mrb[0].mxu0 %v1749
          %v1961 = vpop.f32.mrb[0].mxu0
          %v1962 = vadd.f32 0.0, %v1961
          %v1963 = vpop.f32.mrb[0].mxu0
          %v1964 = vpop.f32.mrb[0].mxu0
          %v1965 = vadd.f32 0.0, %v1964
          %v1966 = vpop.f32.mrb[0].mxu0
          %1967 = vmatprep.mubr.bf16.mxu0 0
          %1968 = vmatmul.mubr.bf16.gmra.mrb[0].mxu0 %v1750
          %v1969 = vpop.f32.mrb[0].mxu0
          %v1970 = vadd.f32 0.0, %v1969
          %v1971 = vpop.f32.mrb[0].mxu0
          %v1972 = vpop.f32.mrb[0].mxu0
          %v1973 = vadd.f32 0.0, %v1972
          %v1974 = vpop.f32.mrb[0].mxu0
          %1975 = vdwg.mxu0
          %v1976 = vpack.c.bf16 %v1853, %v1850
          %v1977 = vpack.c.bf16 %v1861, %v1858
          %v1978 = vpack.c.bf16 %v1869, %v1866
          %v1979 = vpack.c.bf16 %v1877, %v1874
          %v1980 = vpack.c.bf16 %v1885, %v1882
          %v1981 = vpack.c.bf16 %v1893, %v1890
          %v1982 = vpack.c.bf16 %v1901, %v1898
          %v1983 = vpack.c.bf16 %v1909, %v1906
          %v1984 = vpack.c.bf16 %v1917, %v1914
          %v1985 = vpack.c.bf16 %v1925, %v1922
          %v1986 = vpack.c.bf16 %v1933, %v1930
          %v1987 = vpack.c.bf16 %v1941, %v1938
          %v1988 = vpack.c.bf16 %v1949, %v1946
          %v1989 = vpack.c.bf16 %v1957, %v1954
          %v1990 = vpack.c.bf16 %v1965, %v1962
          %v1991 = vpack.c.bf16 %v1973, %v1970
          %v2008 = vunpack.c.l.b16 %v1976
          %v2009 = vunpack.c.h.b16 %v1976
          %v2010 = vunpack.c.l.b16 %v1977
          %v2011 = vunpack.c.h.b16 %v1977
          %v2012 = vunpack.c.l.b16 %v1978
          %v2013 = vunpack.c.h.b16 %v1978
          %v2014 = vunpack.c.l.b16 %v1979
          %v2015 = vunpack.c.h.b16 %v1979
          %v2016 = vunpack.c.l.b16 %v1980
          %v2017 = vunpack.c.h.b16 %v1980
          %v2018 = vunpack.c.l.b16 %v1981
          %v2019 = vunpack.c.h.b16 %v1981
          %v2020 = vunpack.c.l.b16 %v1982
          %v2021 = vunpack.c.h.b16 %v1982
          %v2022 = vunpack.c.l.b16 %v1983
          %v2023 = vunpack.c.h.b16 %v1983
          %v2024 = vunpack.c.l.b16 %v1984
          %v2025 = vunpack.c.h.b16 %v1984
          %v2026 = vunpack.c.l.b16 %v1985
          %v2027 = vunpack.c.h.b16 %v1985
          %v2028 = vunpack.c.l.b16 %v1986
          %v2029 = vunpack.c.h.b16 %v1986
          %v2030 = vunpack.c.l.b16 %v1987
          %v2031 = vunpack.c.h.b16 %v1987
          %v2032 = vunpack.c.l.b16 %v1988
          %v2033 = vunpack.c.h.b16 %v1988
          %v2034 = vunpack.c.l.b16 %v1989
          %v2035 = vunpack.c.h.b16 %v1989
          %v2036 = vunpack.c.l.b16 %v1990
          %v2037 = vunpack.c.h.b16 %v1990
          %v2038 = vunpack.c.l.b16 %v1991
          %v2039 = vunpack.c.h.b16 %v1991
          %v2040 = vpack.c.b16 %v2008, %v2008
          %v2041 = vpack.c.b16 %v2009, %v2009
          %v2042 = vpack.c.b16 %v2010, %v2010
          %v2043 = vpack.c.b16 %v2011, %v2011
          %v2044 = vpack.c.b16 %v2012, %v2012
          %v2045 = vpack.c.b16 %v2013, %v2013
          %v2046 = vpack.c.b16 %v2014, %v2014
          %v2047 = vpack.c.b16 %v2015, %v2015
          %v2048 = vpack.c.b16 %v2016, %v2016
          %v2049 = vpack.c.b16 %v2017, %v2017
          %v2050 = vpack.c.b16 %v2018, %v2018
          %v2051 = vpack.c.b16 %v2019, %v2019
          %v2052 = vpack.c.b16 %v2020, %v2020
          %v2053 = vpack.c.b16 %v2021, %v2021
          %v2054 = vpack.c.b16 %v2022, %v2022
          %v2055 = vpack.c.b16 %v2023, %v2023
          %v2056 = vpack.c.b16 %v2024, %v2024
          %v2057 = vpack.c.b16 %v2025, %v2025
          %v2058 = vpack.c.b16 %v2026, %v2026
          %v2059 = vpack.c.b16 %v2027, %v2027
          %v2060 = vpack.c.b16 %v2028, %v2028
          %v2061 = vpack.c.b16 %v2029, %v2029
          %v2062 = vpack.c.b16 %v2030, %v2030
          %v2063 = vpack.c.b16 %v2031, %v2031
          %v2064 = vpack.c.b16 %v2032, %v2032
          %v2065 = vpack.c.b16 %v2033, %v2033
          %v2066 = vpack.c.b16 %v2034, %v2034
          %v2067 = vpack.c.b16 %v2035, %v2035
          %v2068 = vpack.c.b16 %v2036, %v2036
          %v2069 = vpack.c.b16 %v2037, %v2037
          %v2070 = vpack.c.b16 %v2038, %v2038
          %v2071 = vpack.c.b16 %v2039, %v2039
          %2104 = vst [vmem:[%s315] sm:$0xf] %v2040
          %2105 = vst [vmem:[%s315 + $0x4] sm:$0xf] %v2041
          %2106 = vst [vmem:[%s315 + $0x8] sm:$0xf] %v2042
          %2107 = vst [vmem:[%s315 + $0xc] sm:$0xf] %v2043
          %2108 = vst [vmem:[%s315 + $0x10] sm:$0xf] %v2044
          %2109 = vst [vmem:[%s315 + $0x14] sm:$0xf] %v2045
          %2110 = vst [vmem:[%s315 + $0x18] sm:$0xf] %v2046
          %2111 = vst [vmem:[%s315 + $0x1c] sm:$0xf] %v2047
          %2112 = vst [vmem:[%s315 + $0x20] sm:$0xf] %v2048
          %2113 = vst [vmem:[%s315 + $0x24] sm:$0xf] %v2049
          %2114 = vst [vmem:[%s315 + $0x28] sm:$0xf] %v2050
          %2115 = vst [vmem:[%s315 + $0x2c] sm:$0xf] %v2051
          %2116 = vst [vmem:[%s315 + $0x30] sm:$0xf] %v2052
          %2117 = vst [vmem:[%s315 + $0x34] sm:$0xf] %v2053
          %2118 = vst [vmem:[%s315 + $0x38] sm:$0xf] %v2054
          %2119 = vst [vmem:[%s315 + $0x3c] sm:$0xf] %v2055
          %2120 = vst [vmem:[%s315 + $0x40] sm:$0xf] %v2056
          %2121 = vst [vmem:[%s315 + $0x44] sm:$0xf] %v2057
          %2122 = vst [vmem:[%s315 + $0x48] sm:$0xf] %v2058
          %2123 = vst [vmem:[%s315 + $0x4c] sm:$0xf] %v2059
          %2124 = vst [vmem:[%s315 + $0x50] sm:$0xf] %v2060
          %2125 = vst [vmem:[%s315 + $0x54] sm:$0xf] %v2061
          %2126 = vst [vmem:[%s315 + $0x58] sm:$0xf] %v2062
          %2127 = vst [vmem:[%s315 + $0x5c] sm:$0xf] %v2063
          %2128 = vst [vmem:[%s315 + $0x60] sm:$0xf] %v2064
          %2129 = vst [vmem:[%s315 + $0x64] sm:$0xf] %v2065
          %2130 = vst [vmem:[%s315 + $0x68] sm:$0xf] %v2066
          %2131 = vst [vmem:[%s315 + $0x6c] sm:$0xf] %v2067
          %2132 = vst [vmem:[%s315 + $0x70] sm:$0xf] %v2068
          %2133 = vst [vmem:[%s315 + $0x74] sm:$0xf] %v2069
          %2134 = vst [vmem:[%s315 + $0x78] sm:$0xf] %v2070
          %2135 = vst [vmem:[%s315 + $0x7c] sm:$0xf] %v2071
        $region68: #{tpu_custom_call.1} parent=39 // pred_fallthru
          _
        %s2136 = sand.u32 %s156, 1
        %s2137 = scalar_lea.sflag [#allocation5], %s2136
        %s2138 = sand.u32 %s156, 1
        %s2139 = smul.addr %s2138, 128
        %s2140 = scalar_lea.vmem [#allocation12], %s2139
        // Predicated region
        $region69: #{tpu_custom_call.1} parent=39 // pred_check
          %p2141 = pneg %p166
        $region70: #{tpu_custom_call.1} parent=39 // pred_check_branch
          %2143 = sbr.rel (%p2141) target = $region72
        $region71: #{tpu_custom_call.1} parent=39 // pred_region
          %s2144 = smul.u32 32, %s28
          %s2146 = ssub.s32 2048, 2048
          %2147 = vsyncadd %s2137, %s2146
          %s2148 = smul.addr %s2144, 64
          %s2149 = scalar_lea.hbm %s5, %s2148
          %s2150 = sshll.u32 %s2140, 4
          %s2151 = int_to_ptr.vmem [resolvable:$true] %s2150
          %2156 = dma.vmem_to_hbm [thread:$0]  %s2151, 2048, %s2149, %s2137, 64, 64, 4
        $region72: #{tpu_custom_call.1} parent=39 // pred_fallthru
          _
      $region40: #{tpu_custom_call.1} parent=5 // pred_fallthru
        _
      %p2157 = scmp.le.s32.totalorder 2, %s19
      // Predicated region
      $region73: #{tpu_custom_call.1} parent=5 // pred_check
        %p2158 = pneg %p2157
      $region74: #{tpu_custom_call.1} parent=5 // pred_check_branch
        %2160 = sbr.rel (%p2158) target = $region76
      $region75: #{tpu_custom_call.1} parent=5 // pred_region
        %s2161 = ssub.s32 %s19, 2
        // Predicated region
        $region77: #{tpu_custom_call.1} parent=75 // pred_check
          %p2162 = pneg %p172
        $region78: #{tpu_custom_call.1} parent=75 // pred_check_branch
          %2164 = sbr.rel (%p2162) target = $region80
        $region79: #{tpu_custom_call.1} parent=75 // pred_region
          %s2165 = sand.u32 %s157, 1
          %s2166 = scalar_lea.sflag [#allocation5], %s2165
          %s2167 = sand.u32 %s157, 1
          %s2168 = smul.addr %s2167, 128
          %s2169 = scalar_lea.vmem [#allocation12], %s2168
          %2170 = dma.done %s2166, 2048
        $region80: #{tpu_custom_call.1} parent=75 // pred_fallthru
          _
      $region76: #{tpu_custom_call.1} parent=5 // pred_fallthru
        _
    $region6: #{tpu_custom_call.1} parent=1 // loop_footer
      %s23 = sadd.s32 1, %s19
    $region7: #{tpu_custom_call.1} parent=1 // loop_footer_branch
      %18 = sbr.rel target = $region3
    $region8: #{tpu_custom_call.1} parent=1 // loop_exit
      _
    %2171 = vsyncpa [#allocation4], 1
    %s2172 = scalar_lea.sflag [#allocation4], 1
    %2173 = vsyncpa %s2172, 1
    %2174 = vsyncpa [#allocation7], 1
    %2175 = vsyncpa [#allocation10], 1
    %2176 = vsyncpa [#allocation5], 1
    %s2177 = scalar_lea.sflag [#allocation5], 1
    %2178 = vsyncpa %s2177, 1

</llo_original>
